<compile_context>
chip_gen: v7x
topology: tpu7x:2x2x1
jax: 0.10.0
libtpu: 0.0.40
codegen_flags: <defaults>
</compile_context>

<pallas_src>
import functools

import jax
import jax.numpy as jnp
from jax import lax
from jax.experimental import pallas as pl
from jax.experimental.pallas import tpu as pltpu

EPS = 1e-5  # BatchNorm1d default eps

_VMEM = pl.BlockSpec(memory_space=pltpu.MemorySpace.VMEM)


# ------------------------------ Pallas kernel ------------------------------- #

def _pixelcnn_kernel(x_ref, c_ref, masks_ref,
                     wpa_ref, wca_ref, ba_ref, ga_ref, bta_ref,
                     wb_ref, bb_ref, gb_ref, btb_ref,
                     wo_ref, bo_ref,
                     o_ref, h_ref, slab_ref,
                     *, hidden, num_layers, inv_m):
    """Fused PixelCNN forward. Activations are (channels, positions); MXU ops in bf16."""

    keep = masks_ref[0:1, :]    # 1 at positions whose t-1 neighbour is in the same sequence
    valid = masks_ref[1:2, :]   # 1 at real (non lane-padding) positions

    def gate_bn(pre, gamma, beta):
        # Gated activation via the tanh identity: sigmoid(z) = 0.5*(1 + tanh(z/2));
        # the 0.5 pre-scale of the sigmoid branch is already folded into weights/bias,
        # so ONE tanh over the whole (2*hidden, M) slab covers both branches.
        t = jnp.tanh(pre)
        g = t[:hidden, :] * (0.5 * t[hidden:, :] + 0.5)
        # BatchNorm1d (training mode): batch stats over the N*L valid positions.
        gm = g * valid                                # drop lane padding from the stats
        s1 = jnp.sum(gm, axis=1, keepdims=True)
        s2 = jnp.sum(gm * g, axis=1, keepdims=True)
        mean = s1 * inv_m
        var = s2 * inv_m - mean * mean                # single-pass E[g^2] - mean^2 (f32)
        scale = gamma * lax.rsqrt(var + EPS)
        shift = beta - mean * scale
        return g * scale + shift

    # Condition rows of the activation slab are layer-invariant: write them once.
    slab_ref[2 * hidden:, :] = c_ref[...]

    # ---- input layer: mask 'A' (only the t-1 tap survives; no residual yet) ----
    x = x_ref[...]
    xprev = (pltpu.roll(x, shift=1, axis=1) * keep).astype(jnp.bfloat16)
    pre = (jnp.dot(wpa_ref[...], xprev, preferred_element_type=jnp.float32)
           + jnp.dot(wca_ref[...], c_ref[...], preferred_element_type=jnp.float32)
           + ba_ref[...])
    h_ref[...] = gate_bn(pre, ga_ref[...], bta_ref[...])

    # ---- num_layers x (mask-'B' gated conv + BN + residual), statically unrolled ----
    for i in range(num_layers):
        h = h_ref[...]                                            # f32 residual stream
        hprev = pltpu.roll(h, shift=1, axis=1) * keep             # zero at sequence starts
        slab_ref[:hidden, :] = hprev.astype(jnp.bfloat16)
        slab_ref[hidden:2 * hidden, :] = h.astype(jnp.bfloat16)
        # One fused K = 2*hidden + cond bf16 matmul: [wp | wx | wc] @ [hprev; h; c].
        pre = (jnp.dot(wb_ref[i], slab_ref[...], preferred_element_type=jnp.float32)
               + bb_ref[i])
        h_ref[...] = gate_bn(pre, gb_ref[i], btb_ref[i]) + h      # residual == previous h

    # ---- 1x1 output head: lane-dense (num_embeddings, M) store (kept f32) ----
    o_ref[...] = (jnp.dot(wo_ref[...], h_ref[...], preferred_element_type=jnp.float32)
                  + bo_ref[...])


# ------------------------------ JAX wrapper --------------------------------- #

@jax.jit
def pixelcnn_forward(x_ncl, cond_ncl, params):
    """Matches PixelCNN.forward: x (N, C_in, L), condition (N, E, L) -> (N, num_emb, L)."""
    x = x_ncl.astype(jnp.float32)
    c = cond_ncl.astype(jnp.float32)
    n, cin, l = x.shape
    e = c.shape[1]
    m = n * l
    mp = ((m + 127) // 128) * 128                      # pad positions to a lane multiple

    pi = params["input"]
    hidden = pi["gamma"].shape[0]
    cin_pad = pi["wp"].shape[1]
    num_layers = len(params["layers"])
    num_emb = params["wo"].shape[0]
    e_pad = ((e + 15) // 16) * 16                      # bf16 sublane-tile alignment

    # NCL -> (C, N*L): channels on sublanes, positions on lanes.
    x_cm = jnp.transpose(x, (1, 0, 2)).reshape(cin, m)
    c_cm = jnp.transpose(c, (1, 0, 2)).reshape(e, m)
    x_cm = jnp.pad(x_cm, ((0, cin_pad - cin), (0, mp - m)))
    c_cm = jnp.pad(c_cm, ((0, e_pad - e), (0, mp - m))).astype(jnp.bfloat16)

    pos = jnp.arange(mp)
    valid = pos < m                                    # real positions
    keep = ((pos % l) != 0) & valid                    # non-sequence-start positions
    masks = jnp.stack([keep, valid]).astype(jnp.float32)          # (2, mp) packed

    # Fold the sigmoid-branch 0.5 pre-scale (tanh identity) into weights and biases.
    half = jnp.concatenate([jnp.ones((hidden, 1), jnp.float32),
                            jnp.full((hidden, 1), 0.5, jnp.float32)], axis=0)

    def pad_cond(w):                                   # (2H, E) -> (2H, e_pad)
        return jnp.pad(w, ((0, 0), (0, e_pad - e)))

    wpa = (pi["wp"] * half).astype(jnp.bfloat16)
    wca = (pad_cond(pi["wc"]) * half).astype(jnp.bfloat16)
    ba = pi["b"] * half

    # Fuse [wp | wx | wc] per 'B' layer into one (2H, 2H + e_pad) bf16 matrix, stacked.
    wb = jnp.stack([(jnp.concatenate([p["wp"], p["wx"], pad_cond(p["wc"])], axis=1)
                     * half).astype(jnp.bfloat16) for p in params["layers"]])
    bb = jnp.stack([p["b"] * half for p in params["layers"]])
    gb = jnp.stack([p["gamma"] for p in params["layers"]])
    btb = jnp.stack([p["beta"] for p in params["layers"]])

    kernel = functools.partial(_pixelcnn_kernel, hidden=hidden,
                               num_layers=num_layers, inv_m=1.0 / m)

    operands = (x_cm, c_cm, masks, wpa, wca, ba, pi["gamma"], pi["beta"],
                wb, bb, gb, btb, params["wo"], params["bo"])

    # Gridless call: everything is resident once. Size the VMEM limit from the actual
    # buffers (+ generous margin) and cap at 56 MiB so it also fits a v7x TensorCore.
    need = sum(int(a.size) * a.dtype.itemsize for a in operands)
    need += num_emb * mp * 4                                   # output
    need += hidden * mp * 4 + (2 * hidden + e_pad) * mp * 2    # h scratch + bf16 slab
    vmem_limit = min(max(2 * need + (4 << 20), 32 << 20), 56 << 20)

    out = pl.pallas_call(
        kernel,
        out_shape=jax.ShapeDtypeStruct((num_emb, mp), jnp.float32),
        in_specs=[_VMEM] * len(operands),
        out_specs=_VMEM,
        scratch_shapes=[pltpu.VMEM((hidden, mp), jnp.float32),                 # h (f32)
                        pltpu.VMEM((2 * hidden + e_pad, mp), jnp.bfloat16)],   # [hprev;h;c]
        compiler_params=pltpu.CompilerParams(vmem_limit_bytes=vmem_limit),
    )(*operands)

    out = out[:, :m].reshape(num_emb, n, l)
    return jnp.transpose(out, (1, 0, 2))               # back to (N, num_embeddings, L)


# ---------------------------- Parameter creation ---------------------------- #

def make_block_params(key, cin, cout, cond_dim, mask_type, real_cin=None):
    """Weights stored channels-on-sublanes: (out, in). Branch1 rows [0:cout] -> tanh,
    branch2 rows [cout:2*cout] -> sigmoid. Masked convs have bias=False; only the
    condition 1x1 convs carry a bias (matching the torch module)."""
    ks = jax.random.split(key, 4)

    def rn(k, shape, scale=0.3):
        return scale * jax.random.normal(k, shape, jnp.float32)

    wp = rn(ks[0], (2 * cout, cin))                    # previous-step (t-1) tap
    wc = rn(ks[2], (2 * cout, cond_dim))               # condition 1x1 conv weights
    b = rn(ks[3], (2 * cout, 1), 0.05)                 # condition 1x1 conv biases
    if real_cin is not None and real_cin < cin:
        # Zero the padding columns so math equals a real `real_cin`-channel conv.
        col_mask = (jnp.arange(cin) < real_cin).astype(jnp.float32)[None, :]
        wp = wp * col_mask
    p = dict(wp=wp, wc=wc, b=b,
             gamma=jnp.ones((cout, 1), jnp.float32),   # BatchNorm1d default affine init
             beta=jnp.zeros((cout, 1), jnp.float32))
    if mask_type == "B":
        # Mask 'B' additionally keeps the current-step (t) tap; mask 'A' drops it.
        wx = rn(ks[1], (2 * cout, cin))
        if real_cin is not None and real_cin < cin:
            wx = wx * col_mask
        p["wx"] = wx
    return p


def init_params(key, num_embeddings, cond_dim, input_channels, hidden, num_layers):
    cin_pad = max(8, ((input_channels + 7) // 8) * 8)  # pad tiny C_in to a sublane multiple
    keys = jax.random.split(key, num_layers + 3)
    return {
        "input": make_block_params(keys[0], cin_pad, hidden, cond_dim, "A",
                                   real_cin=input_channels),
        "layers": [make_block_params(keys[i + 1], hidden, hidden, cond_dim, "B")
                   for i in range(num_layers)],
        "wo": 0.3 * jax.random.normal(keys[-2], (num_embeddings, hidden), jnp.float32),
        "bo": 0.05 * jax.random.normal(keys[-1], (num_embeddings, 1), jnp.float32),
    }


# ------------------------- Pure-JAX reference check ------------------------- #

def reference_forward(x_ncl, cond_ncl, params):
    """Torch-train()-equivalent forward; matmul operands cast to bf16 (f32 accumulate)
    to mirror the kernel's MXU precision, everything else in f32."""
    bf = jnp.bfloat16
    x = x_ncl.astype(jnp.float32)
    c = cond_ncl.astype(jnp.float32)
    n, cin, l = x.shape
    cin_pad = params["input"]["wp"].shape[1]
    if cin < cin_pad:
        x = jnp.pad(x, ((0, 0), (0, cin_pad - cin), (0, 0)))
    c_b = c.astype(bf)

    def shift_prev(h):                                  # h[:, :, t-1], zero at t == 0
        return jnp.concatenate([jnp.zeros_like(h[:, :, :1]), h[:, :, :-1]], axis=2)

    def block(h, p):
        hidden = p["gamma"].shape[0]
        pre = jnp.einsum("oc,ncl->nol", p["wp"].astype(bf), shift_prev(h).astype(bf),
                         preferred_element_type=jnp.float32)
        if "wx" in p:
            pre = pre + jnp.einsum("oc,ncl->nol", p["wx"].astype(bf), h.astype(bf),
                                   preferred_element_type=jnp.float32)
        pre = pre + jnp.einsum("oe,nel->nol", p["wc"].astype(bf), c_b,
                               preferred_element_type=jnp.float32) + p["b"][None]
        g = jnp.tanh(pre[:, :hidden, :]) * jax.nn.sigmoid(pre[:, hidden:, :])
        mean = jnp.mean(g, axis=(0, 2), keepdims=True)
        var = jnp.mean((g - mean) ** 2, axis=(0, 2), keepdims=True)
        return (g - mean) * lax.rsqrt(var + EPS) * p["gamma"][None] + p["beta"][None]

    h = block(x, params["input"])
    residual = h
    for p in params["layers"]:
        h = block(h, p) + residual
        residual = h
    return jnp.einsum("oc,ncl->nol", params["wo"], h) + params["bo"][None]


# ----------------------------------- main ----------------------------------- #

if __name__ == "__main__":
    N, L = 2, 16
    INPUT_CHANNELS = 1
    HIDDEN = 32
    COND_DIM = 16
    NUM_EMBEDDINGS = 8
    NUM_LAYERS = 4  # (module default is 10; small value for a quick test)

    key = jax.random.PRNGKey(0)
    kx, kc, kp = jax.random.split(key, 3)
    x = jax.random.normal(kx, (N, INPUT_CHANNELS, L), jnp.float32)   # NCL like torch
    cond = jax.random.normal(kc, (N, COND_DIM, L), jnp.float32)      # NCL like torch
    params = init_params(kp, NUM_EMBEDDINGS, COND_DIM, INPUT_CHANNELS,
                         HIDDEN, NUM_LAYERS)

    out = jax.block_until_ready(pixelcnn_forward(x, cond, params))
    ref = jax.block_until_ready(reference_forward(x, cond, params))

    assert out.shape == (N, NUM_EMBEDDINGS, L), out.shape
    if not jnp.allclose(out, ref, atol=2e-2, rtol=2e-2):
        err = float(jnp.max(jnp.abs(out - ref)))
        raise AssertionError(f"Pallas output mismatch vs reference (max abs err {err})")

    print("KERNEL_OK")
</pallas_src>

<mosaic_0001>
module attributes {stable_mosaic.version = 11 : i64} {
  func.func @_pixelcnn_kernel(%arg0: memref<8x128xf32, #tpu.memory_space<vmem>>, %arg1: memref<16x128xbf16, #tpu.memory_space<vmem>>, %arg2: memref<2x128xf32, #tpu.memory_space<vmem>>, %arg3: memref<64x8xbf16, #tpu.memory_space<vmem>>, %arg4: memref<64x16xbf16, #tpu.memory_space<vmem>>, %arg5: memref<64x1xf32, #tpu.memory_space<vmem>>, %arg6: memref<32x1xf32, #tpu.memory_space<vmem>>, %arg7: memref<32x1xf32, #tpu.memory_space<vmem>>, %arg8: memref<4x64x80xbf16, #tpu.memory_space<vmem>>, %arg9: memref<4x64x1xf32, #tpu.memory_space<vmem>>, %arg10: memref<4x32x1xf32, #tpu.memory_space<vmem>>, %arg11: memref<4x32x1xf32, #tpu.memory_space<vmem>>, %arg12: memref<8x32xf32, #tpu.memory_space<vmem>>, %arg13: memref<8x1xf32, #tpu.memory_space<vmem>>, %arg14: memref<8x128xf32, #tpu.memory_space<vmem>>, %arg15: memref<32x128xf32, #tpu.memory_space<vmem>>, %arg16: memref<80x128xbf16, #tpu.memory_space<vmem>>) attributes {dimension_semantics = [], scalar_prefetch = 0 : i64, scratch_operands = 2 : i64, tpu.core_type = #tpu.core_type<tc>} {
    %c0 = arith.constant 0 : index
    %c0_0 = arith.constant 0 : index
    %0 = vector.load %arg2[%c0, %c0_0] : memref<2x128xf32, #tpu.memory_space<vmem>>, vector<1x128xf32>
    %c1 = arith.constant 1 : index
    %c0_1 = arith.constant 0 : index
    %1 = vector.load %arg2[%c1, %c0_1] : memref<2x128xf32, #tpu.memory_space<vmem>>, vector<1x128xf32>
    %c0_2 = arith.constant 0 : index
    %c0_3 = arith.constant 0 : index
    %2 = vector.load %arg1[%c0_2, %c0_3] : memref<16x128xbf16, #tpu.memory_space<vmem>>, vector<16x128xbf16>
    %c64 = arith.constant 64 : index
    %c0_4 = arith.constant 0 : index
    %3 = vector.load %arg16[%c64, %c0_4] : memref<80x128xbf16, #tpu.memory_space<vmem>>, vector<16x128xbf16>
    tpu.vector_store %arg16[%c64, %c0_4], %2 {strides = array<i32>} : memref<80x128xbf16, #tpu.memory_space<vmem>>, vector<16x128xbf16>,
    %c0_5 = arith.constant 0 : index
    %c0_6 = arith.constant 0 : index
    %4 = vector.load %arg0[%c0_5, %c0_6] : memref<8x128xf32, #tpu.memory_space<vmem>>, vector<8x128xf32>
    %c1_i32 = arith.constant 1 : i32
    %5 = tpu.dynamic_rotate %4 by %c1_i32 dim 1 : vector<8x128xf32>, i32 -> vector<8x128xf32>
    %6 = vector.broadcast %0 : vector<1x128xf32> to vector<8x128xf32>
    %7 = arith.mulf %5, %6 : vector<8x128xf32>
    %8 = arith.truncf %7 : vector<8x128xf32> to vector<8x128xbf16>
    %c0_7 = arith.constant 0 : index
    %c0_8 = arith.constant 0 : index
    %9 = vector.load %arg3[%c0_7, %c0_8] : memref<64x8xbf16, #tpu.memory_space<vmem>>, vector<64x8xbf16>
    %cst = arith.constant dense<0.000000e+00> : vector<64x128xf32>
    %10 = tpu.matmul %9, %8, %cst {dimension_numbers = #tpu.dot_dimension_numbers<[1], [0], [0], [1], [0, 0, 1, 1], [], []>} : vector<64x8xbf16>, vector<8x128xbf16>, vector<64x128xf32> -> vector<64x128xf32>
    %c0_9 = arith.constant 0 : index
    %c0_10 = arith.constant 0 : index
    %11 = vector.load %arg4[%c0_9, %c0_10] : memref<64x16xbf16, #tpu.memory_space<vmem>>, vector<64x16xbf16>
    %c0_11 = arith.constant 0 : index
    %c0_12 = arith.constant 0 : index
    %12 = vector.load %arg1[%c0_11, %c0_12] : memref<16x128xbf16, #tpu.memory_space<vmem>>, vector<16x128xbf16>
    %cst_13 = arith.constant dense<0.000000e+00> : vector<64x128xf32>
    %13 = tpu.matmul %11, %12, %cst_13 {dimension_numbers = #tpu.dot_dimension_numbers<[1], [0], [0], [1], [0, 0, 1, 1], [], []>} : vector<64x16xbf16>, vector<16x128xbf16>, vector<64x128xf32> -> vector<64x128xf32>
    %14 = arith.addf %10, %13 : vector<64x128xf32>
    %c0_14 = arith.constant 0 : index
    %c0_15 = arith.constant 0 : index
    %15 = vector.load %arg5[%c0_14, %c0_15] : memref<64x1xf32, #tpu.memory_space<vmem>>, vector<64x1xf32>
    %16 = vector.broadcast %15 : vector<64x1xf32> to vector<64x128xf32>
    %17 = arith.addf %14, %16 : vector<64x128xf32>
    %c0_16 = arith.constant 0 : index
    %c0_17 = arith.constant 0 : index
    %18 = vector.load %arg6[%c0_16, %c0_17] : memref<32x1xf32, #tpu.memory_space<vmem>>, vector<32x1xf32>
    %c0_18 = arith.constant 0 : index
    %c0_19 = arith.constant 0 : index
    %19 = vector.load %arg7[%c0_18, %c0_19] : memref<32x1xf32, #tpu.memory_space<vmem>>, vector<32x1xf32>
    %20 = math.tanh %17 : vector<64x128xf32>
    %21 = vector.extract_strided_slice %20 {offsets = [0, 0], sizes = [32, 128], strides = [1, 1]} : vector<64x128xf32> to vector<32x128xf32>
    %22 = vector.extract_strided_slice %20 {offsets = [32, 0], sizes = [32, 128], strides = [1, 1]} : vector<64x128xf32> to vector<32x128xf32>
    %cst_20 = arith.constant 5.000000e-01 : f32
    %23 = vector.broadcast %cst_20 : f32 to vector<32x128xf32>
    %24 = arith.mulf %23, %22 : vector<32x128xf32>
    %cst_21 = arith.constant 5.000000e-01 : f32
    %25 = vector.broadcast %cst_21 : f32 to vector<32x128xf32>
    %26 = arith.addf %24, %25 : vector<32x128xf32>
    %27 = arith.mulf %21, %26 : vector<32x128xf32>
    %28 = vector.broadcast %1 : vector<1x128xf32> to vector<32x128xf32>
    %29 = arith.mulf %27, %28 : vector<32x128xf32>
    %cst_22 = arith.constant dense<0.000000e+00> : vector<32xf32>
    %30 = vector.multi_reduction <add>, %29, %cst_22 [1] : vector<32x128xf32> to vector<32xf32>
    %31 = vector.shape_cast %30 : vector<32xf32> to vector<32x1xf32>
    %32 = arith.mulf %29, %27 : vector<32x128xf32>
    %cst_23 = arith.constant dense<0.000000e+00> : vector<32xf32>
    %33 = vector.multi_reduction <add>, %32, %cst_23 [1] : vector<32x128xf32> to vector<32xf32>
    %34 = vector.shape_cast %33 : vector<32xf32> to vector<32x1xf32>
    %cst_24 = arith.constant 3.125000e-02 : f32
    %35 = vector.broadcast %cst_24 : f32 to vector<32x1xf32>
    %36 = arith.mulf %31, %35 : vector<32x1xf32>
    %cst_25 = arith.constant 3.125000e-02 : f32
    %37 = vector.broadcast %cst_25 : f32 to vector<32x1xf32>
    %38 = arith.mulf %34, %37 : vector<32x1xf32>
    %39 = arith.mulf %36, %36 : vector<32x1xf32>
    %40 = arith.subf %38, %39 : vector<32x1xf32>
    %cst_26 = arith.constant 9.99999974E-6 : f32
    %41 = vector.broadcast %cst_26 : f32 to vector<32x1xf32>
    %42 = arith.addf %40, %41 : vector<32x1xf32>
    %43 = math.rsqrt %42 : vector<32x1xf32>
    %44 = arith.mulf %18, %43 : vector<32x1xf32>
    %45 = arith.mulf %36, %44 : vector<32x1xf32>
    %46 = arith.subf %19, %45 : vector<32x1xf32>
    %47 = vector.broadcast %44 : vector<32x1xf32> to vector<32x128xf32>
    %48 = arith.mulf %27, %47 : vector<32x128xf32>
    %49 = vector.broadcast %46 : vector<32x1xf32> to vector<32x128xf32>
    %50 = arith.addf %48, %49 : vector<32x128xf32>
    %c0_27 = arith.constant 0 : index
    %c0_28 = arith.constant 0 : index
    %51 = vector.load %arg15[%c0_27, %c0_28] : memref<32x128xf32, #tpu.memory_space<vmem>>, vector<32x128xf32>
    tpu.vector_store %arg15[%c0_27, %c0_28], %50 {strides = array<i32>} : memref<32x128xf32, #tpu.memory_space<vmem>>, vector<32x128xf32>,
    %c0_29 = arith.constant 0 : index
    %c0_30 = arith.constant 0 : index
    %52 = vector.load %arg15[%c0_29, %c0_30] : memref<32x128xf32, #tpu.memory_space<vmem>>, vector<32x128xf32>
    %c1_i32_31 = arith.constant 1 : i32
    %53 = tpu.dynamic_rotate %52 by %c1_i32_31 dim 1 : vector<32x128xf32>, i32 -> vector<32x128xf32>
    %54 = vector.broadcast %0 : vector<1x128xf32> to vector<32x128xf32>
    %55 = arith.mulf %53, %54 : vector<32x128xf32>
    %56 = arith.truncf %55 : vector<32x128xf32> to vector<32x128xbf16>
    %c0_32 = arith.constant 0 : index
    %c0_33 = arith.constant 0 : index
    %57 = vector.load %arg16[%c0_32, %c0_33] : memref<80x128xbf16, #tpu.memory_space<vmem>>, vector<32x128xbf16>
    tpu.vector_store %arg16[%c0_32, %c0_33], %56 {strides = array<i32>} : memref<80x128xbf16, #tpu.memory_space<vmem>>, vector<32x128xbf16>,
    %58 = arith.truncf %52 : vector<32x128xf32> to vector<32x128xbf16>
    %c32 = arith.constant 32 : index
    %c0_34 = arith.constant 0 : index
    %59 = vector.load %arg16[%c32, %c0_34] : memref<80x128xbf16, #tpu.memory_space<vmem>>, vector<32x128xbf16>
    tpu.vector_store %arg16[%c32, %c0_34], %58 {strides = array<i32>} : memref<80x128xbf16, #tpu.memory_space<vmem>>, vector<32x128xbf16>,
    %c0_35 = arith.constant 0 : index
    %c0_36 = arith.constant 0 : index
    %c0_37 = arith.constant 0 : index
    %60 = vector.load %arg8[%c0_35, %c0_36, %c0_37] : memref<4x64x80xbf16, #tpu.memory_space<vmem>>, vector<1x64x80xbf16>
    %61 = vector.shape_cast %60 : vector<1x64x80xbf16> to vector<64x80xbf16>
    %c0_38 = arith.constant 0 : index
    %c0_39 = arith.constant 0 : index
    %62 = vector.load %arg16[%c0_38, %c0_39] : memref<80x128xbf16, #tpu.memory_space<vmem>>, vector<80x128xbf16>
    %cst_40 = arith.constant dense<0.000000e+00> : vector<64x128xf32>
    %63 = tpu.matmul %61, %62, %cst_40 {dimension_numbers = #tpu.dot_dimension_numbers<[1], [0], [0], [1], [0, 0, 1, 1], [], []>} : vector<64x80xbf16>, vector<80x128xbf16>, vector<64x128xf32> -> vector<64x128xf32>
    %c0_41 = arith.constant 0 : index
    %c0_42 = arith.constant 0 : index
    %c0_43 = arith.constant 0 : index
    %64 = vector.load %arg9[%c0_41, %c0_42, %c0_43] : memref<4x64x1xf32, #tpu.memory_space<vmem>>, vector<1x64x1xf32>
    %65 = vector.shape_cast %64 : vector<1x64x1xf32> to vector<64x1xf32>
    %66 = vector.broadcast %65 : vector<64x1xf32> to vector<64x128xf32>
    %67 = arith.addf %63, %66 : vector<64x128xf32>
    %c0_44 = arith.constant 0 : index
    %c0_45 = arith.constant 0 : index
    %c0_46 = arith.constant 0 : index
    %68 = vector.load %arg10[%c0_44, %c0_45, %c0_46] : memref<4x32x1xf32, #tpu.memory_space<vmem>>, vector<1x32x1xf32>
    %69 = vector.shape_cast %68 : vector<1x32x1xf32> to vector<32x1xf32>
    %c0_47 = arith.constant 0 : index
    %c0_48 = arith.constant 0 : index
    %c0_49 = arith.constant 0 : index
    %70 = vector.load %arg11[%c0_47, %c0_48, %c0_49] : memref<4x32x1xf32, #tpu.memory_space<vmem>>, vector<1x32x1xf32>
    %71 = vector.shape_cast %70 : vector<1x32x1xf32> to vector<32x1xf32>
    %72 = math.tanh %67 : vector<64x128xf32>
    %73 = vector.extract_strided_slice %72 {offsets = [0, 0], sizes = [32, 128], strides = [1, 1]} : vector<64x128xf32> to vector<32x128xf32>
    %74 = vector.extract_strided_slice %72 {offsets = [32, 0], sizes = [32, 128], strides = [1, 1]} : vector<64x128xf32> to vector<32x128xf32>
    %cst_50 = arith.constant 5.000000e-01 : f32
    %75 = vector.broadcast %cst_50 : f32 to vector<32x128xf32>
    %76 = arith.mulf %75, %74 : vector<32x128xf32>
    %cst_51 = arith.constant 5.000000e-01 : f32
    %77 = vector.broadcast %cst_51 : f32 to vector<32x128xf32>
    %78 = arith.addf %76, %77 : vector<32x128xf32>
    %79 = arith.mulf %73, %78 : vector<32x128xf32>
    %80 = vector.broadcast %1 : vector<1x128xf32> to vector<32x128xf32>
    %81 = arith.mulf %79, %80 : vector<32x128xf32>
    %cst_52 = arith.constant dense<0.000000e+00> : vector<32xf32>
    %82 = vector.multi_reduction <add>, %81, %cst_52 [1] : vector<32x128xf32> to vector<32xf32>
    %83 = vector.shape_cast %82 : vector<32xf32> to vector<32x1xf32>
    %84 = arith.mulf %81, %79 : vector<32x128xf32>
    %cst_53 = arith.constant dense<0.000000e+00> : vector<32xf32>
    %85 = vector.multi_reduction <add>, %84, %cst_53 [1] : vector<32x128xf32> to vector<32xf32>
    %86 = vector.shape_cast %85 : vector<32xf32> to vector<32x1xf32>
    %cst_54 = arith.constant 3.125000e-02 : f32
    %87 = vector.broadcast %cst_54 : f32 to vector<32x1xf32>
    %88 = arith.mulf %83, %87 : vector<32x1xf32>
    %cst_55 = arith.constant 3.125000e-02 : f32
    %89 = vector.broadcast %cst_55 : f32 to vector<32x1xf32>
    %90 = arith.mulf %86, %89 : vector<32x1xf32>
    %91 = arith.mulf %88, %88 : vector<32x1xf32>
    %92 = arith.subf %90, %91 : vector<32x1xf32>
    %cst_56 = arith.constant 9.99999974E-6 : f32
    %93 = vector.broadcast %cst_56 : f32 to vector<32x1xf32>
    %94 = arith.addf %92, %93 : vector<32x1xf32>
    %95 = math.rsqrt %94 : vector<32x1xf32>
    %96 = arith.mulf %69, %95 : vector<32x1xf32>
    %97 = arith.mulf %88, %96 : vector<32x1xf32>
    %98 = arith.subf %71, %97 : vector<32x1xf32>
    %99 = vector.broadcast %96 : vector<32x1xf32> to vector<32x128xf32>
    %100 = arith.mulf %79, %99 : vector<32x128xf32>
    %101 = vector.broadcast %98 : vector<32x1xf32> to vector<32x128xf32>
    %102 = arith.addf %100, %101 : vector<32x128xf32>
    %103 = arith.addf %102, %52 : vector<32x128xf32>
    %c0_57 = arith.constant 0 : index
    %c0_58 = arith.constant 0 : index
    %104 = vector.load %arg15[%c0_57, %c0_58] : memref<32x128xf32, #tpu.memory_space<vmem>>, vector<32x128xf32>
    tpu.vector_store %arg15[%c0_57, %c0_58], %103 {strides = array<i32>} : memref<32x128xf32, #tpu.memory_space<vmem>>, vector<32x128xf32>,
    %c0_59 = arith.constant 0 : index
    %c0_60 = arith.constant 0 : index
    %105 = vector.load %arg15[%c0_59, %c0_60] : memref<32x128xf32, #tpu.memory_space<vmem>>, vector<32x128xf32>
    %c1_i32_61 = arith.constant 1 : i32
    %106 = tpu.dynamic_rotate %105 by %c1_i32_61 dim 1 : vector<32x128xf32>, i32 -> vector<32x128xf32>
    %107 = vector.broadcast %0 : vector<1x128xf32> to vector<32x128xf32>
    %108 = arith.mulf %106, %107 : vector<32x128xf32>
    %109 = arith.truncf %108 : vector<32x128xf32> to vector<32x128xbf16>
    %c0_62 = arith.constant 0 : index
    %c0_63 = arith.constant 0 : index
    %110 = vector.load %arg16[%c0_62, %c0_63] : memref<80x128xbf16, #tpu.memory_space<vmem>>, vector<32x128xbf16>
    tpu.vector_store %arg16[%c0_62, %c0_63], %109 {strides = array<i32>} : memref<80x128xbf16, #tpu.memory_space<vmem>>, vector<32x128xbf16>,
    %111 = arith.truncf %105 : vector<32x128xf32> to vector<32x128xbf16>
    %c32_64 = arith.constant 32 : index
    %c0_65 = arith.constant 0 : index
    %112 = vector.load %arg16[%c32_64, %c0_65] : memref<80x128xbf16, #tpu.memory_space<vmem>>, vector<32x128xbf16>
    tpu.vector_store %arg16[%c32_64, %c0_65], %111 {strides = array<i32>} : memref<80x128xbf16, #tpu.memory_space<vmem>>, vector<32x128xbf16>,
    %c1_66 = arith.constant 1 : index
    %c0_67 = arith.constant 0 : index
    %c0_68 = arith.constant 0 : index
    %113 = vector.load %arg8[%c1_66, %c0_67, %c0_68] : memref<4x64x80xbf16, #tpu.memory_space<vmem>>, vector<1x64x80xbf16>
    %114 = vector.shape_cast %113 : vector<1x64x80xbf16> to vector<64x80xbf16>
    %c0_69 = arith.constant 0 : index
    %c0_70 = arith.constant 0 : index
    %115 = vector.load %arg16[%c0_69, %c0_70] : memref<80x128xbf16, #tpu.memory_space<vmem>>, vector<80x128xbf16>
    %cst_71 = arith.constant dense<0.000000e+00> : vector<64x128xf32>
    %116 = tpu.matmul %114, %115, %cst_71 {dimension_numbers = #tpu.dot_dimension_numbers<[1], [0], [0], [1], [0, 0, 1, 1], [], []>} : vector<64x80xbf16>, vector<80x128xbf16>, vector<64x128xf32> -> vector<64x128xf32>
    %c1_72 = arith.constant 1 : index
    %c0_73 = arith.constant 0 : index
    %c0_74 = arith.constant 0 : index
    %117 = vector.load %arg9[%c1_72, %c0_73, %c0_74] : memref<4x64x1xf32, #tpu.memory_space<vmem>>, vector<1x64x1xf32>
    %118 = vector.shape_cast %117 : vector<1x64x1xf32> to vector<64x1xf32>
    %119 = vector.broadcast %118 : vector<64x1xf32> to vector<64x128xf32>
    %120 = arith.addf %116, %119 : vector<64x128xf32>
    %c1_75 = arith.constant 1 : index
    %c0_76 = arith.constant 0 : index
    %c0_77 = arith.constant 0 : index
    %121 = vector.load %arg10[%c1_75, %c0_76, %c0_77] : memref<4x32x1xf32, #tpu.memory_space<vmem>>, vector<1x32x1xf32>
    %122 = vector.shape_cast %121 : vector<1x32x1xf32> to vector<32x1xf32>
    %c1_78 = arith.constant 1 : index
    %c0_79 = arith.constant 0 : index
    %c0_80 = arith.constant 0 : index
    %123 = vector.load %arg11[%c1_78, %c0_79, %c0_80] : memref<4x32x1xf32, #tpu.memory_space<vmem>>, vector<1x32x1xf32>
    %124 = vector.shape_cast %123 : vector<1x32x1xf32> to vector<32x1xf32>
    %125 = math.tanh %120 : vector<64x128xf32>
    %126 = vector.extract_strided_slice %125 {offsets = [0, 0], sizes = [32, 128], strides = [1, 1]} : vector<64x128xf32> to vector<32x128xf32>
    %127 = vector.extract_strided_slice %125 {offsets = [32, 0], sizes = [32, 128], strides = [1, 1]} : vector<64x128xf32> to vector<32x128xf32>
    %cst_81 = arith.constant 5.000000e-01 : f32
    %128 = vector.broadcast %cst_81 : f32 to vector<32x128xf32>
    %129 = arith.mulf %128, %127 : vector<32x128xf32>
    %cst_82 = arith.constant 5.000000e-01 : f32
    %130 = vector.broadcast %cst_82 : f32 to vector<32x128xf32>
    %131 = arith.addf %129, %130 : vector<32x128xf32>
    %132 = arith.mulf %126, %131 : vector<32x128xf32>
    %133 = vector.broadcast %1 : vector<1x128xf32> to vector<32x128xf32>
    %134 = arith.mulf %132, %133 : vector<32x128xf32>
    %cst_83 = arith.constant dense<0.000000e+00> : vector<32xf32>
    %135 = vector.multi_reduction <add>, %134, %cst_83 [1] : vector<32x128xf32> to vector<32xf32>
    %136 = vector.shape_cast %135 : vector<32xf32> to vector<32x1xf32>
    %137 = arith.mulf %134, %132 : vector<32x128xf32>
    %cst_84 = arith.constant dense<0.000000e+00> : vector<32xf32>
    %138 = vector.multi_reduction <add>, %137, %cst_84 [1] : vector<32x128xf32> to vector<32xf32>
    %139 = vector.shape_cast %138 : vector<32xf32> to vector<32x1xf32>
    %cst_85 = arith.constant 3.125000e-02 : f32
    %140 = vector.broadcast %cst_85 : f32 to vector<32x1xf32>
    %141 = arith.mulf %136, %140 : vector<32x1xf32>
    %cst_86 = arith.constant 3.125000e-02 : f32
    %142 = vector.broadcast %cst_86 : f32 to vector<32x1xf32>
    %143 = arith.mulf %139, %142 : vector<32x1xf32>
    %144 = arith.mulf %141, %141 : vector<32x1xf32>
    %145 = arith.subf %143, %144 : vector<32x1xf32>
    %cst_87 = arith.constant 9.99999974E-6 : f32
    %146 = vector.broadcast %cst_87 : f32 to vector<32x1xf32>
    %147 = arith.addf %145, %146 : vector<32x1xf32>
    %148 = math.rsqrt %147 : vector<32x1xf32>
    %149 = arith.mulf %122, %148 : vector<32x1xf32>
    %150 = arith.mulf %141, %149 : vector<32x1xf32>
    %151 = arith.subf %124, %150 : vector<32x1xf32>
    %152 = vector.broadcast %149 : vector<32x1xf32> to vector<32x128xf32>
    %153 = arith.mulf %132, %152 : vector<32x128xf32>
    %154 = vector.broadcast %151 : vector<32x1xf32> to vector<32x128xf32>
    %155 = arith.addf %153, %154 : vector<32x128xf32>
    %156 = arith.addf %155, %105 : vector<32x128xf32>
    %c0_88 = arith.constant 0 : index
    %c0_89 = arith.constant 0 : index
    %157 = vector.load %arg15[%c0_88, %c0_89] : memref<32x128xf32, #tpu.memory_space<vmem>>, vector<32x128xf32>
    tpu.vector_store %arg15[%c0_88, %c0_89], %156 {strides = array<i32>} : memref<32x128xf32, #tpu.memory_space<vmem>>, vector<32x128xf32>,
    %c0_90 = arith.constant 0 : index
    %c0_91 = arith.constant 0 : index
    %158 = vector.load %arg15[%c0_90, %c0_91] : memref<32x128xf32, #tpu.memory_space<vmem>>, vector<32x128xf32>
    %c1_i32_92 = arith.constant 1 : i32
    %159 = tpu.dynamic_rotate %158 by %c1_i32_92 dim 1 : vector<32x128xf32>, i32 -> vector<32x128xf32>
    %160 = vector.broadcast %0 : vector<1x128xf32> to vector<32x128xf32>
    %161 = arith.mulf %159, %160 : vector<32x128xf32>
    %162 = arith.truncf %161 : vector<32x128xf32> to vector<32x128xbf16>
    %c0_93 = arith.constant 0 : index
    %c0_94 = arith.constant 0 : index
    %163 = vector.load %arg16[%c0_93, %c0_94] : memref<80x128xbf16, #tpu.memory_space<vmem>>, vector<32x128xbf16>
    tpu.vector_store %arg16[%c0_93, %c0_94], %162 {strides = array<i32>} : memref<80x128xbf16, #tpu.memory_space<vmem>>, vector<32x128xbf16>,
    %164 = arith.truncf %158 : vector<32x128xf32> to vector<32x128xbf16>
    %c32_95 = arith.constant 32 : index
    %c0_96 = arith.constant 0 : index
    %165 = vector.load %arg16[%c32_95, %c0_96] : memref<80x128xbf16, #tpu.memory_space<vmem>>, vector<32x128xbf16>
    tpu.vector_store %arg16[%c32_95, %c0_96], %164 {strides = array<i32>} : memref<80x128xbf16, #tpu.memory_space<vmem>>, vector<32x128xbf16>,
    %c2 = arith.constant 2 : index
    %c0_97 = arith.constant 0 : index
    %c0_98 = arith.constant 0 : index
    %166 = vector.load %arg8[%c2, %c0_97, %c0_98] : memref<4x64x80xbf16, #tpu.memory_space<vmem>>, vector<1x64x80xbf16>
    %167 = vector.shape_cast %166 : vector<1x64x80xbf16> to vector<64x80xbf16>
    %c0_99 = arith.constant 0 : index
    %c0_100 = arith.constant 0 : index
    %168 = vector.load %arg16[%c0_99, %c0_100] : memref<80x128xbf16, #tpu.memory_space<vmem>>, vector<80x128xbf16>
    %cst_101 = arith.constant dense<0.000000e+00> : vector<64x128xf32>
    %169 = tpu.matmul %167, %168, %cst_101 {dimension_numbers = #tpu.dot_dimension_numbers<[1], [0], [0], [1], [0, 0, 1, 1], [], []>} : vector<64x80xbf16>, vector<80x128xbf16>, vector<64x128xf32> -> vector<64x128xf32>
    %c2_102 = arith.constant 2 : index
    %c0_103 = arith.constant 0 : index
    %c0_104 = arith.constant 0 : index
    %170 = vector.load %arg9[%c2_102, %c0_103, %c0_104] : memref<4x64x1xf32, #tpu.memory_space<vmem>>, vector<1x64x1xf32>
    %171 = vector.shape_cast %170 : vector<1x64x1xf32> to vector<64x1xf32>
    %172 = vector.broadcast %171 : vector<64x1xf32> to vector<64x128xf32>
    %173 = arith.addf %169, %172 : vector<64x128xf32>
    %c2_105 = arith.constant 2 : index
    %c0_106 = arith.constant 0 : index
    %c0_107 = arith.constant 0 : index
    %174 = vector.load %arg10[%c2_105, %c0_106, %c0_107] : memref<4x32x1xf32, #tpu.memory_space<vmem>>, vector<1x32x1xf32>
    %175 = vector.shape_cast %174 : vector<1x32x1xf32> to vector<32x1xf32>
    %c2_108 = arith.constant 2 : index
    %c0_109 = arith.constant 0 : index
    %c0_110 = arith.constant 0 : index
    %176 = vector.load %arg11[%c2_108, %c0_109, %c0_110] : memref<4x32x1xf32, #tpu.memory_space<vmem>>, vector<1x32x1xf32>
    %177 = vector.shape_cast %176 : vector<1x32x1xf32> to vector<32x1xf32>
    %178 = math.tanh %173 : vector<64x128xf32>
    %179 = vector.extract_strided_slice %178 {offsets = [0, 0], sizes = [32, 128], strides = [1, 1]} : vector<64x128xf32> to vector<32x128xf32>
    %180 = vector.extract_strided_slice %178 {offsets = [32, 0], sizes = [32, 128], strides = [1, 1]} : vector<64x128xf32> to vector<32x128xf32>
    %cst_111 = arith.constant 5.000000e-01 : f32
    %181 = vector.broadcast %cst_111 : f32 to vector<32x128xf32>
    %182 = arith.mulf %181, %180 : vector<32x128xf32>
    %cst_112 = arith.constant 5.000000e-01 : f32
    %183 = vector.broadcast %cst_112 : f32 to vector<32x128xf32>
    %184 = arith.addf %182, %183 : vector<32x128xf32>
    %185 = arith.mulf %179, %184 : vector<32x128xf32>
    %186 = vector.broadcast %1 : vector<1x128xf32> to vector<32x128xf32>
    %187 = arith.mulf %185, %186 : vector<32x128xf32>
    %cst_113 = arith.constant dense<0.000000e+00> : vector<32xf32>
    %188 = vector.multi_reduction <add>, %187, %cst_113 [1] : vector<32x128xf32> to vector<32xf32>
    %189 = vector.shape_cast %188 : vector<32xf32> to vector<32x1xf32>
    %190 = arith.mulf %187, %185 : vector<32x128xf32>
    %cst_114 = arith.constant dense<0.000000e+00> : vector<32xf32>
    %191 = vector.multi_reduction <add>, %190, %cst_114 [1] : vector<32x128xf32> to vector<32xf32>
    %192 = vector.shape_cast %191 : vector<32xf32> to vector<32x1xf32>
    %cst_115 = arith.constant 3.125000e-02 : f32
    %193 = vector.broadcast %cst_115 : f32 to vector<32x1xf32>
    %194 = arith.mulf %189, %193 : vector<32x1xf32>
    %cst_116 = arith.constant 3.125000e-02 : f32
    %195 = vector.broadcast %cst_116 : f32 to vector<32x1xf32>
    %196 = arith.mulf %192, %195 : vector<32x1xf32>
    %197 = arith.mulf %194, %194 : vector<32x1xf32>
    %198 = arith.subf %196, %197 : vector<32x1xf32>
    %cst_117 = arith.constant 9.99999974E-6 : f32
    %199 = vector.broadcast %cst_117 : f32 to vector<32x1xf32>
    %200 = arith.addf %198, %199 : vector<32x1xf32>
    %201 = math.rsqrt %200 : vector<32x1xf32>
    %202 = arith.mulf %175, %201 : vector<32x1xf32>
    %203 = arith.mulf %194, %202 : vector<32x1xf32>
    %204 = arith.subf %177, %203 : vector<32x1xf32>
    %205 = vector.broadcast %202 : vector<32x1xf32> to vector<32x128xf32>
    %206 = arith.mulf %185, %205 : vector<32x128xf32>
    %207 = vector.broadcast %204 : vector<32x1xf32> to vector<32x128xf32>
    %208 = arith.addf %206, %207 : vector<32x128xf32>
    %209 = arith.addf %208, %158 : vector<32x128xf32>
    %c0_118 = arith.constant 0 : index
    %c0_119 = arith.constant 0 : index
    %210 = vector.load %arg15[%c0_118, %c0_119] : memref<32x128xf32, #tpu.memory_space<vmem>>, vector<32x128xf32>
    tpu.vector_store %arg15[%c0_118, %c0_119], %209 {strides = array<i32>} : memref<32x128xf32, #tpu.memory_space<vmem>>, vector<32x128xf32>,
    %c0_120 = arith.constant 0 : index
    %c0_121 = arith.constant 0 : index
    %211 = vector.load %arg15[%c0_120, %c0_121] : memref<32x128xf32, #tpu.memory_space<vmem>>, vector<32x128xf32>
    %c1_i32_122 = arith.constant 1 : i32
    %212 = tpu.dynamic_rotate %211 by %c1_i32_122 dim 1 : vector<32x128xf32>, i32 -> vector<32x128xf32>
    %213 = vector.broadcast %0 : vector<1x128xf32> to vector<32x128xf32>
    %214 = arith.mulf %212, %213 : vector<32x128xf32>
    %215 = arith.truncf %214 : vector<32x128xf32> to vector<32x128xbf16>
    %c0_123 = arith.constant 0 : index
    %c0_124 = arith.constant 0 : index
    %216 = vector.load %arg16[%c0_123, %c0_124] : memref<80x128xbf16, #tpu.memory_space<vmem>>, vector<32x128xbf16>
    tpu.vector_store %arg16[%c0_123, %c0_124], %215 {strides = array<i32>} : memref<80x128xbf16, #tpu.memory_space<vmem>>, vector<32x128xbf16>,
    %217 = arith.truncf %211 : vector<32x128xf32> to vector<32x128xbf16>
    %c32_125 = arith.constant 32 : index
    %c0_126 = arith.constant 0 : index
    %218 = vector.load %arg16[%c32_125, %c0_126] : memref<80x128xbf16, #tpu.memory_space<vmem>>, vector<32x128xbf16>
    tpu.vector_store %arg16[%c32_125, %c0_126], %217 {strides = array<i32>} : memref<80x128xbf16, #tpu.memory_space<vmem>>, vector<32x128xbf16>,
    %c3 = arith.constant 3 : index
    %c0_127 = arith.constant 0 : index
    %c0_128 = arith.constant 0 : index
    %219 = vector.load %arg8[%c3, %c0_127, %c0_128] : memref<4x64x80xbf16, #tpu.memory_space<vmem>>, vector<1x64x80xbf16>
    %220 = vector.shape_cast %219 : vector<1x64x80xbf16> to vector<64x80xbf16>
    %c0_129 = arith.constant 0 : index
    %c0_130 = arith.constant 0 : index
    %221 = vector.load %arg16[%c0_129, %c0_130] : memref<80x128xbf16, #tpu.memory_space<vmem>>, vector<80x128xbf16>
    %cst_131 = arith.constant dense<0.000000e+00> : vector<64x128xf32>
    %222 = tpu.matmul %220, %221, %cst_131 {dimension_numbers = #tpu.dot_dimension_numbers<[1], [0], [0], [1], [0, 0, 1, 1], [], []>} : vector<64x80xbf16>, vector<80x128xbf16>, vector<64x128xf32> -> vector<64x128xf32>
    %c3_132 = arith.constant 3 : index
    %c0_133 = arith.constant 0 : index
    %c0_134 = arith.constant 0 : index
    %223 = vector.load %arg9[%c3_132, %c0_133, %c0_134] : memref<4x64x1xf32, #tpu.memory_space<vmem>>, vector<1x64x1xf32>
    %224 = vector.shape_cast %223 : vector<1x64x1xf32> to vector<64x1xf32>
    %225 = vector.broadcast %224 : vector<64x1xf32> to vector<64x128xf32>
    %226 = arith.addf %222, %225 : vector<64x128xf32>
    %c3_135 = arith.constant 3 : index
    %c0_136 = arith.constant 0 : index
    %c0_137 = arith.constant 0 : index
    %227 = vector.load %arg10[%c3_135, %c0_136, %c0_137] : memref<4x32x1xf32, #tpu.memory_space<vmem>>, vector<1x32x1xf32>
    %228 = vector.shape_cast %227 : vector<1x32x1xf32> to vector<32x1xf32>
    %c3_138 = arith.constant 3 : index
    %c0_139 = arith.constant 0 : index
    %c0_140 = arith.constant 0 : index
    %229 = vector.load %arg11[%c3_138, %c0_139, %c0_140] : memref<4x32x1xf32, #tpu.memory_space<vmem>>, vector<1x32x1xf32>
    %230 = vector.shape_cast %229 : vector<1x32x1xf32> to vector<32x1xf32>
    %231 = math.tanh %226 : vector<64x128xf32>
    %232 = vector.extract_strided_slice %231 {offsets = [0, 0], sizes = [32, 128], strides = [1, 1]} : vector<64x128xf32> to vector<32x128xf32>
    %233 = vector.extract_strided_slice %231 {offsets = [32, 0], sizes = [32, 128], strides = [1, 1]} : vector<64x128xf32> to vector<32x128xf32>
    %cst_141 = arith.constant 5.000000e-01 : f32
    %234 = vector.broadcast %cst_141 : f32 to vector<32x128xf32>
    %235 = arith.mulf %234, %233 : vector<32x128xf32>
    %cst_142 = arith.constant 5.000000e-01 : f32
    %236 = vector.broadcast %cst_142 : f32 to vector<32x128xf32>
    %237 = arith.addf %235, %236 : vector<32x128xf32>
    %238 = arith.mulf %232, %237 : vector<32x128xf32>
    %239 = vector.broadcast %1 : vector<1x128xf32> to vector<32x128xf32>
    %240 = arith.mulf %238, %239 : vector<32x128xf32>
    %cst_143 = arith.constant dense<0.000000e+00> : vector<32xf32>
    %241 = vector.multi_reduction <add>, %240, %cst_143 [1] : vector<32x128xf32> to vector<32xf32>
    %242 = vector.shape_cast %241 : vector<32xf32> to vector<32x1xf32>
    %243 = arith.mulf %240, %238 : vector<32x128xf32>
    %cst_144 = arith.constant dense<0.000000e+00> : vector<32xf32>
    %244 = vector.multi_reduction <add>, %243, %cst_144 [1] : vector<32x128xf32> to vector<32xf32>
    %245 = vector.shape_cast %244 : vector<32xf32> to vector<32x1xf32>
    %cst_145 = arith.constant 3.125000e-02 : f32
    %246 = vector.broadcast %cst_145 : f32 to vector<32x1xf32>
    %247 = arith.mulf %242, %246 : vector<32x1xf32>
    %cst_146 = arith.constant 3.125000e-02 : f32
    %248 = vector.broadcast %cst_146 : f32 to vector<32x1xf32>
    %249 = arith.mulf %245, %248 : vector<32x1xf32>
    %250 = arith.mulf %247, %247 : vector<32x1xf32>
    %251 = arith.subf %249, %250 : vector<32x1xf32>
    %cst_147 = arith.constant 9.99999974E-6 : f32
    %252 = vector.broadcast %cst_147 : f32 to vector<32x1xf32>
    %253 = arith.addf %251, %252 : vector<32x1xf32>
    %254 = math.rsqrt %253 : vector<32x1xf32>
    %255 = arith.mulf %228, %254 : vector<32x1xf32>
    %256 = arith.mulf %247, %255 : vector<32x1xf32>
    %257 = arith.subf %230, %256 : vector<32x1xf32>
    %258 = vector.broadcast %255 : vector<32x1xf32> to vector<32x128xf32>
    %259 = arith.mulf %238, %258 : vector<32x128xf32>
    %260 = vector.broadcast %257 : vector<32x1xf32> to vector<32x128xf32>
    %261 = arith.addf %259, %260 : vector<32x128xf32>
    %262 = arith.addf %261, %211 : vector<32x128xf32>
    %c0_148 = arith.constant 0 : index
    %c0_149 = arith.constant 0 : index
    %263 = vector.load %arg15[%c0_148, %c0_149] : memref<32x128xf32, #tpu.memory_space<vmem>>, vector<32x128xf32>
    tpu.vector_store %arg15[%c0_148, %c0_149], %262 {strides = array<i32>} : memref<32x128xf32, #tpu.memory_space<vmem>>, vector<32x128xf32>,
    %c0_150 = arith.constant 0 : index
    %c0_151 = arith.constant 0 : index
    %264 = vector.load %arg12[%c0_150, %c0_151] : memref<8x32xf32, #tpu.memory_space<vmem>>, vector<8x32xf32>
    %c0_152 = arith.constant 0 : index
    %c0_153 = arith.constant 0 : index
    %265 = vector.load %arg15[%c0_152, %c0_153] : memref<32x128xf32, #tpu.memory_space<vmem>>, vector<32x128xf32>
    %cst_154 = arith.constant dense<0.000000e+00> : vector<8x128xf32>
    %266 = tpu.matmul %264, %265, %cst_154 {dimension_numbers = #tpu.dot_dimension_numbers<[1], [0], [0], [1], [0, 0, 1, 1], [], []>} : vector<8x32xf32>, vector<32x128xf32>, vector<8x128xf32> -> vector<8x128xf32>
    %c0_155 = arith.constant 0 : index
    %c0_156 = arith.constant 0 : index
    %267 = vector.load %arg13[%c0_155, %c0_156] : memref<8x1xf32, #tpu.memory_space<vmem>>, vector<8x1xf32>
    %268 = vector.broadcast %267 : vector<8x1xf32> to vector<8x128xf32>
    %269 = arith.addf %266, %268 : vector<8x128xf32>
    %c0_157 = arith.constant 0 : index
    %c0_158 = arith.constant 0 : index
    %270 = vector.load %arg14[%c0_157, %c0_158] : memref<8x128xf32, #tpu.memory_space<vmem>>, vector<8x128xf32>
    tpu.vector_store %arg14[%c0_157, %c0_158], %269 {strides = array<i32>} : memref<8x128xf32, #tpu.memory_space<vmem>>, vector<8x128xf32>,
    return
  }
}

</mosaic_0001>

<llo_original>
// kernel: mul.37
$region0: #{mul.37}
  #allocation0 [shape = 's32[1]{0}', space=sflag, size = 0x4, scoped, tag = 'scoped memory for mul.37']
  %s0 = inlined_call_operand.vmem [shape: f32[64,1], index: 0, kind: input, shape index: {}]
  %s1 = inlined_call_operand.vmem [shape: f32[64,1], index: 1, kind: input, shape index: {}]
  %s2 = inlined_call_operand.vmem [shape: f32[64,1], index: 2, kind: output, shape index: {}]
  %v3 = vld [vmem:[%s0] sm:$0xff]
  %v4 = vld [vmem:[%s1] sm:$0xff]
  %5 = xla_tuple %v3, %v4
  %6 = xla_tuple %5
  %v7 = vmul.f32 %v3, %v4
  %8 = xla_tuple %v7
  %9 = vst [vmem:[%s2] sm:$0xff] %v7
  %s10 = scalar_lea.vmem %s0, 8
  %v11 = vld [vmem:[%s10] sm:$0xff]
  %s12 = scalar_lea.vmem %s1, 8
  %v13 = vld [vmem:[%s12] sm:$0xff]
  %14 = xla_tuple %v11, %v13
  %15 = xla_tuple %14
  %v16 = vmul.f32 %v11, %v13
  %17 = xla_tuple %v16
  %s18 = scalar_lea.vmem %s2, 8
  %19 = vst [vmem:[%s18] sm:$0xff] %v16
  %s20 = scalar_lea.vmem %s0, 16
  %v21 = vld [vmem:[%s20] sm:$0xff]
  %s22 = scalar_lea.vmem %s1, 16
  %v23 = vld [vmem:[%s22] sm:$0xff]
  %24 = xla_tuple %v21, %v23
  %25 = xla_tuple %24
  %v26 = vmul.f32 %v21, %v23
  %27 = xla_tuple %v26
  %s28 = scalar_lea.vmem %s2, 16
  %29 = vst [vmem:[%s28] sm:$0xff] %v26
  %s30 = scalar_lea.vmem %s0, 24
  %v31 = vld [vmem:[%s30] sm:$0xff]
  %s32 = scalar_lea.vmem %s1, 24
  %v33 = vld [vmem:[%s32] sm:$0xff]
  %34 = xla_tuple %v31, %v33
  %35 = xla_tuple %34
  %v36 = vmul.f32 %v31, %v33
  %37 = xla_tuple %v36
  %s38 = scalar_lea.vmem %s2, 24
  %39 = vst [vmem:[%s38] sm:$0xff] %v36
  %s40 = scalar_lea.vmem %s0, 32
  %v41 = vld [vmem:[%s40] sm:$0xff]
  %s42 = scalar_lea.vmem %s1, 32
  %v43 = vld [vmem:[%s42] sm:$0xff]
  %44 = xla_tuple %v41, %v43
  %45 = xla_tuple %44
  %v46 = vmul.f32 %v41, %v43
  %47 = xla_tuple %v46
  %s48 = scalar_lea.vmem %s2, 32
  %49 = vst [vmem:[%s48] sm:$0xff] %v46
  %s50 = scalar_lea.vmem %s0, 40
  %v51 = vld [vmem:[%s50] sm:$0xff]
  %s52 = scalar_lea.vmem %s1, 40
  %v53 = vld [vmem:[%s52] sm:$0xff]
  %54 = xla_tuple %v51, %v53
  %55 = xla_tuple %54
  %v56 = vmul.f32 %v51, %v53
  %57 = xla_tuple %v56
  %s58 = scalar_lea.vmem %s2, 40
  %59 = vst [vmem:[%s58] sm:$0xff] %v56
  %s60 = scalar_lea.vmem %s0, 48
  %v61 = vld [vmem:[%s60] sm:$0xff]
  %s62 = scalar_lea.vmem %s1, 48
  %v63 = vld [vmem:[%s62] sm:$0xff]
  %64 = xla_tuple %v61, %v63
  %65 = xla_tuple %64
  %v66 = vmul.f32 %v61, %v63
  %67 = xla_tuple %v66
  %s68 = scalar_lea.vmem %s2, 48
  %69 = vst [vmem:[%s68] sm:$0xff] %v66
  %s70 = scalar_lea.vmem %s0, 56
  %v71 = vld [vmem:[%s70] sm:$0xff]
  %s72 = scalar_lea.vmem %s1, 56
  %v73 = vld [vmem:[%s72] sm:$0xff]
  %74 = xla_tuple %v71, %v73
  %75 = xla_tuple %74
  %v76 = vmul.f32 %v71, %v73
  %77 = xla_tuple %v76
  %s78 = scalar_lea.vmem %s2, 56
  %79 = vst [vmem:[%s78] sm:$0xff] %v76

// kernel: pixelcnn_forward.1
$region0: #{pixelcnn_forward.1}
  #allocation0 [shape = 'u32[]', space=smem, size = 0x4, offset = 0x4, fixed_abs, tag = 'smem constant byte address 0x4 - core index']
  #allocation1 [shape = 'u32[144,128]{1,0:T(1,128)}', space=vmem, size = 0x12000, scoped, tag = 'internal scratch']
  #allocation2 [shape = 'f32[32,128]{1,0:T(8,128)}', space=vmem, size = 0x4000, scoped, tag = 'scratch operand']
  #allocation3 [shape = 'bf16[80,128]{1,0:T(16,128)(2,1)}', space=vmem, size = 0x5000, scoped, tag = 'scratch operand']
  %s0 = inlined_call_operand.vmem [shape: f32[8,128], index: 0, kind: input, shape index: {}]
  %s1 = inlined_call_operand.vmem [shape: bf16[16,128], index: 1, kind: input, shape index: {}]
  %s2 = inlined_call_operand.vmem [shape: f32[2,128], index: 2, kind: input, shape index: {}]
  %s3 = inlined_call_operand.vmem [shape: bf16[64,8], index: 3, kind: input, shape index: {}]
  %s4 = inlined_call_operand.vmem [shape: bf16[64,16], index: 4, kind: input, shape index: {}]
  %s5 = inlined_call_operand.vmem [shape: f32[64,1], index: 5, kind: input, shape index: {}]
  %s6 = inlined_call_operand.vmem [shape: f32[32,1], index: 6, kind: input, shape index: {}]
  %s7 = inlined_call_operand.vmem [shape: f32[32,1], index: 7, kind: input, shape index: {}]
  %s8 = inlined_call_operand.vmem [shape: bf16[4,64,80], index: 8, kind: input, shape index: {}]
  %s9 = inlined_call_operand.vmem [shape: f32[4,64,1], index: 9, kind: input, shape index: {}]
  %s10 = inlined_call_operand.vmem [shape: f32[4,32,1], index: 10, kind: input, shape index: {}]
  %s11 = inlined_call_operand.vmem [shape: f32[4,32,1], index: 11, kind: input, shape index: {}]
  %s12 = inlined_call_operand.vmem [shape: f32[8,32], index: 12, kind: input, shape index: {}]
  %s13 = inlined_call_operand.vmem [shape: f32[8,1], index: 13, kind: input, shape index: {}]
  %s14 = inlined_call_operand.vmem [shape: f32[8,128], index: 14, kind: output, shape index: {}]
  %s15 = sld [smem:[#allocation0]]
  $region66: #{pixelcnn_forward.1} parent=0
    _
  %s17 = ssub.s32 1, %s15
  %s18 = scalar_select 0, %s17, %s15
  // Predicated region
  $region2: #{pixelcnn_forward.1} parent=0 // pred_check
    _
  $region3: #{pixelcnn_forward.1} parent=0 // pred_check_branch
    %20 = sbr.rel (0) target = $region5
  $region4: #{pixelcnn_forward.1} parent=0 // pred_region
    _
  $region5: #{pixelcnn_forward.1} parent=0 // pred_fallthru
    _
  // Predicated region
  $region6: #{pixelcnn_forward.1} parent=0 // pred_check
    _
  $region7: #{pixelcnn_forward.1} parent=0 // pred_check_branch
    %22 = sbr.rel (0) target = $region9
  $region8: #{pixelcnn_forward.1} parent=0 // pred_region
    _
  $region9: #{pixelcnn_forward.1} parent=0 // pred_fallthru
    _
  // Predicated region
  $region10: #{pixelcnn_forward.1} parent=0 // pred_check
    _
  $region11: #{pixelcnn_forward.1} parent=0 // pred_check_branch
    %24 = sbr.rel (0) target = $region13
  $region12: #{pixelcnn_forward.1} parent=0 // pred_region
    _
  $region13: #{pixelcnn_forward.1} parent=0 // pred_fallthru
    _
  // Predicated region
  $region14: #{pixelcnn_forward.1} parent=0 // pred_check
    _
  $region15: #{pixelcnn_forward.1} parent=0 // pred_check_branch
    %26 = sbr.rel (0) target = $region17
  $region16: #{pixelcnn_forward.1} parent=0 // pred_region
    _
  $region17: #{pixelcnn_forward.1} parent=0 // pred_fallthru
    _
  // Predicated region
  $region18: #{pixelcnn_forward.1} parent=0 // pred_check
    _
  $region19: #{pixelcnn_forward.1} parent=0 // pred_check_branch
    %28 = sbr.rel (0) target = $region21
  $region20: #{pixelcnn_forward.1} parent=0 // pred_region
    _
  $region21: #{pixelcnn_forward.1} parent=0 // pred_fallthru
    _
  // Predicated region
  $region22: #{pixelcnn_forward.1} parent=0 // pred_check
    _
  $region23: #{pixelcnn_forward.1} parent=0 // pred_check_branch
    %30 = sbr.rel (0) target = $region25
  $region24: #{pixelcnn_forward.1} parent=0 // pred_region
    _
  $region25: #{pixelcnn_forward.1} parent=0 // pred_fallthru
    _
  // Predicated region
  $region26: #{pixelcnn_forward.1} parent=0 // pred_check
    _
  $region27: #{pixelcnn_forward.1} parent=0 // pred_check_branch
    %32 = sbr.rel (0) target = $region29
  $region28: #{pixelcnn_forward.1} parent=0 // pred_region
    _
  $region29: #{pixelcnn_forward.1} parent=0 // pred_fallthru
    _
  // Predicated region
  $region30: #{pixelcnn_forward.1} parent=0 // pred_check
    _
  $region31: #{pixelcnn_forward.1} parent=0 // pred_check_branch
    %34 = sbr.rel (0) target = $region33
  $region32: #{pixelcnn_forward.1} parent=0 // pred_region
    _
  $region33: #{pixelcnn_forward.1} parent=0 // pred_fallthru
    _
  // Predicated region
  $region34: #{pixelcnn_forward.1} parent=0 // pred_check
    _
  $region35: #{pixelcnn_forward.1} parent=0 // pred_check_branch
    %36 = sbr.rel (0) target = $region37
  $region36: #{pixelcnn_forward.1} parent=0 // pred_region
    _
  $region37: #{pixelcnn_forward.1} parent=0 // pred_fallthru
    _
  // Predicated region
  $region38: #{pixelcnn_forward.1} parent=0 // pred_check
    _
  $region39: #{pixelcnn_forward.1} parent=0 // pred_check_branch
    %38 = sbr.rel (0) target = $region41
  $region40: #{pixelcnn_forward.1} parent=0 // pred_region
    _
  $region41: #{pixelcnn_forward.1} parent=0 // pred_fallthru
    _
  // Predicated region
  $region42: #{pixelcnn_forward.1} parent=0 // pred_check
    _
  $region43: #{pixelcnn_forward.1} parent=0 // pred_check_branch
    %40 = sbr.rel (0) target = $region45
  $region44: #{pixelcnn_forward.1} parent=0 // pred_region
    _
  $region45: #{pixelcnn_forward.1} parent=0 // pred_fallthru
    _
  // Predicated region
  $region46: #{pixelcnn_forward.1} parent=0 // pred_check
    _
  $region47: #{pixelcnn_forward.1} parent=0 // pred_check_branch
    %42 = sbr.rel (0) target = $region49
  $region48: #{pixelcnn_forward.1} parent=0 // pred_region
    _
  $region49: #{pixelcnn_forward.1} parent=0 // pred_fallthru
    _
  // Predicated region
  $region50: #{pixelcnn_forward.1} parent=0 // pred_check
    _
  $region51: #{pixelcnn_forward.1} parent=0 // pred_check_branch
    %44 = sbr.rel (0) target = $region53
  $region52: #{pixelcnn_forward.1} parent=0 // pred_region
    _
  $region53: #{pixelcnn_forward.1} parent=0 // pred_fallthru
    _
  // Predicated region
  $region54: #{pixelcnn_forward.1} parent=0 // pred_check
    _
  $region55: #{pixelcnn_forward.1} parent=0 // pred_check_branch
    %46 = sbr.rel (0) target = $region57
  $region56: #{pixelcnn_forward.1} parent=0 // pred_region
    _
  $region57: #{pixelcnn_forward.1} parent=0 // pred_fallthru
    _
  %v48 = vld [vmem:[%s2] sm:$0x1]
  %v49 = vld [vmem:[%s2 + $0x1] sm:$0x1]
  %v50 = vld [vmem:[%s1] sm:$0xf]
  %v51 = vld [vmem:[%s1 + $0x4] sm:$0xf]
  %v54 = vunpack.c.l.b16 %v50
  %v55 = vunpack.c.l.b16 %v51
  %v56 = vpack.c.b16 %v55, %v54
  %58 = vst [vmem:[#allocation3 + $0x20] sm:$0xff] %v56
  %v59 = vld [vmem:[%s0] sm:$0xff]
  %60 = vrot.lane.b32.xlu0 %v59, 1
  %v61 = vpop.permute.xlu0 %60
  %v62 = vlaneseq
  %v63 = vshrl.u32 %v62, 7
  %v64 = vsub.s32 0, %v63
  %v65 = vrot.slane %v48, %v64
  %v66 = vmul.f32 %v61, %v65
  %v67 = vpack.c.bf16 %v66, %v66
  %v68 = vld [vmem:[%s3] sm:$0xf]
  %v69 = vld [vmem:[%s3 + $0x4] sm:$0xf]
  %v70 = vld [vmem:[%s3 + $0x8] sm:$0xf]
  %v71 = vld [vmem:[%s3 + $0xc] sm:$0xf]
  %v72 = vld [vmem:[%s3 + $0x10] sm:$0xf]
  %v73 = vld [vmem:[%s3 + $0x14] sm:$0xf]
  %v74 = vld [vmem:[%s3 + $0x18] sm:$0xf]
  %v75 = vld [vmem:[%s3 + $0x1c] sm:$0xf]
  %v76 = vld [vmem:[%s4] sm:$0xf]
  %v77 = vld [vmem:[%s4 + $0x4] sm:$0xf]
  %v78 = vld [vmem:[%s4 + $0x8] sm:$0xf]
  %v79 = vld [vmem:[%s4 + $0xc] sm:$0xf]
  %v80 = vld [vmem:[%s4 + $0x10] sm:$0xf]
  %v81 = vld [vmem:[%s4 + $0x14] sm:$0xf]
  %v82 = vld [vmem:[%s4 + $0x18] sm:$0xf]
  %v83 = vld [vmem:[%s4 + $0x1c] sm:$0xf]
  %v84 = vld [vmem:[%s1] sm:$0xf]
  %v85 = vld [vmem:[%s1 + $0x4] sm:$0xf]
  %v94 = vunpack.c.l.b16 %v76
  %v95 = vunpack.c.l.b16 %v77
  %v96 = vunpack.c.l.b16 %v78
  %v97 = vunpack.c.l.b16 %v79
  %v98 = vunpack.c.l.b16 %v80
  %v99 = vunpack.c.l.b16 %v81
  %v100 = vunpack.c.l.b16 %v82
  %v101 = vunpack.c.l.b16 %v83
  %v102 = vpack.c.b16 %v95, %v94
  %v103 = vpack.c.b16 %v97, %v96
  %v104 = vpack.c.b16 %v99, %v98
  %v105 = vpack.c.b16 %v101, %v100
  %v108 = vunpack.c.l.b16 %v84
  %v109 = vunpack.c.l.b16 %v85
  %v110 = vpack.c.b16 %v109, %v108
  %vm112 = vcmask 130048
  %v114 = vsel %vm112, %v102, 0
  %v117 = vsel %vm112, %v103, 0
  %v120 = vsel %vm112, %v104, 0
  %v123 = vsel %vm112, %v105, 0
  %125 = vmatprep.subr.bf16.mxu0 0
  %126 = vmatpush1.bf16.msra.mxu0 %v110
  %127 = vmatprep.subr.bf16.mxu0 0
  %128 = vmatpush1.bf16.msra.mxu0 0
  %129 = vmatprep.subr.bf16.mxu0 0
  %130 = vmatpush1.bf16.msra.mxu0 0
  %131 = vmatprep.subr.bf16.mxu0 0
  %132 = vmatpush1.bf16.msra.mxu0 0
  %133 = vmatprep.subr.bf16.mxu0 0
  %134 = vmatpush1.bf16.msra.mxu0 0
  %135 = vmatprep.subr.bf16.mxu0 0
  %136 = vmatpush1.bf16.msra.mxu0 0
  %137 = vmatprep.subr.bf16.mxu0 0
  %138 = vmatpush1.bf16.msra.mxu0 0
  %139 = vmatprep.subr.bf16.mxu0 0
  %140 = vmatpush1.bf16.msra.mxu0 0
  %141 = vmatprep.subr.bf16.mxu0 0
  %142 = vmatpush1.bf16.msra.mxu0 0
  %143 = vmatprep.subr.bf16.mxu0 0
  %144 = vmatpush1.bf16.msra.mxu0 0
  %145 = vmatprep.subr.bf16.mxu0 0
  %146 = vmatpush1.bf16.msra.mxu0 0
  %147 = vmatprep.subr.bf16.mxu0 0
  %148 = vmatpush1.bf16.msra.mxu0 0
  %149 = vmatprep.subr.bf16.mxu0 0
  %150 = vmatpush1.bf16.msra.mxu0 0
  %151 = vmatprep.subr.bf16.mxu0 0
  %152 = vmatpush1.bf16.msra.mxu0 0
  %153 = vmatprep.subr.bf16.mxu0 0
  %154 = vmatpush1.bf16.msra.mxu0 0
  %155 = vmatprep.subr.bf16.mxu0 0
  %156 = vmatpush1.bf16.msra.mxu0 0
  %157 = vmatprep.mubr.bf16.mxu0 0
  %158 = vmatmul.mubr.bf16.gmra.mrb[0].mxu0 %v114
  %v159 = vpop.f32.mrb[0].mxu0
  %v160 = vadd.f32 0.0, %v159
  %v161 = vpop.f32.mrb[0].mxu0
  %v162 = vpop.f32.mrb[0].mxu0
  %v163 = vadd.f32 0.0, %v162
  %v164 = vpop.f32.mrb[0].mxu0
  %165 = vmatprep.mubr.bf16.mxu0 0
  %166 = vmatmul.mubr.bf16.gmra.mrb[0].mxu0 %v117
  %v167 = vpop.f32.mrb[0].mxu0
  %v168 = vadd.f32 0.0, %v167
  %v169 = vpop.f32.mrb[0].mxu0
  %v170 = vpop.f32.mrb[0].mxu0
  %v171 = vadd.f32 0.0, %v170
  %v172 = vpop.f32.mrb[0].mxu0
  %173 = vmatprep.mubr.bf16.mxu0 0
  %174 = vmatmul.mubr.bf16.gmra.mrb[0].mxu0 %v120
  %v175 = vpop.f32.mrb[0].mxu0
  %v176 = vadd.f32 0.0, %v175
  %v177 = vpop.f32.mrb[0].mxu0
  %v178 = vpop.f32.mrb[0].mxu0
  %v179 = vadd.f32 0.0, %v178
  %v180 = vpop.f32.mrb[0].mxu0
  %181 = vmatprep.mubr.bf16.mxu0 0
  %182 = vmatmul.mubr.bf16.gmra.mrb[0].mxu0 %v123
  %v183 = vpop.f32.mrb[0].mxu0
  %v184 = vadd.f32 0.0, %v183
  %v185 = vpop.f32.mrb[0].mxu0
  %v186 = vpop.f32.mrb[0].mxu0
  %v187 = vadd.f32 0.0, %v186
  %v188 = vpop.f32.mrb[0].mxu0
  %189 = vdwg.mxu0
  %v198 = vunpack.c.l.b16 %v68
  %v199 = vunpack.c.l.b16 %v69
  %v200 = vunpack.c.l.b16 %v70
  %v201 = vunpack.c.l.b16 %v71
  %v202 = vunpack.c.l.b16 %v72
  %v203 = vunpack.c.l.b16 %v73
  %v204 = vunpack.c.l.b16 %v74
  %v205 = vunpack.c.l.b16 %v75
  %v206 = vpack.c.b16 %v199, %v198
  %v207 = vpack.c.b16 %v201, %v200
  %v208 = vpack.c.b16 %v203, %v202
  %v209 = vpack.c.b16 %v205, %v204
  %vm210 = vcmask 64512
  %v212 = vsel %vm210, %v206, 0
  %v215 = vsel %vm210, %v207, 0
  %v218 = vsel %vm210, %v208, 0
  %v221 = vsel %vm210, %v209, 0
  %vm223 = vcmask 1043456
  %v225 = vsel %vm223, %v67, 0
  %227 = vmatprep.subr.bf16.mxu0 0
  %228 = vmatpush1.bf16.msra.mxu0 %v225
  %229 = vmatprep.subr.bf16.mxu0 0
  %230 = vmatpush1.bf16.msra.mxu0 0
  %231 = vmatprep.subr.bf16.mxu0 0
  %232 = vmatpush1.bf16.msra.mxu0 0
  %233 = vmatprep.subr.bf16.mxu0 0
  %234 = vmatpush1.bf16.msra.mxu0 0
  %235 = vmatprep.subr.bf16.mxu0 0
  %236 = vmatpush1.bf16.msra.mxu0 0
  %237 = vmatprep.subr.bf16.mxu0 0
  %238 = vmatpush1.bf16.msra.mxu0 0
  %239 = vmatprep.subr.bf16.mxu0 0
  %240 = vmatpush1.bf16.msra.mxu0 0
  %241 = vmatprep.subr.bf16.mxu0 0
  %242 = vmatpush1.bf16.msra.mxu0 0
  %243 = vmatprep.subr.bf16.mxu0 0
  %244 = vmatpush1.bf16.msra.mxu0 0
  %245 = vmatprep.subr.bf16.mxu0 0
  %246 = vmatpush1.bf16.msra.mxu0 0
  %247 = vmatprep.subr.bf16.mxu0 0
  %248 = vmatpush1.bf16.msra.mxu0 0
  %249 = vmatprep.subr.bf16.mxu0 0
  %250 = vmatpush1.bf16.msra.mxu0 0
  %251 = vmatprep.subr.bf16.mxu0 0
  %252 = vmatpush1.bf16.msra.mxu0 0
  %253 = vmatprep.subr.bf16.mxu0 0
  %254 = vmatpush1.bf16.msra.mxu0 0
  %255 = vmatprep.subr.bf16.mxu0 0
  %256 = vmatpush1.bf16.msra.mxu0 0
  %257 = vmatprep.subr.bf16.mxu0 0
  %258 = vmatpush1.bf16.msra.mxu0 0
  %259 = vmatprep.mubr.bf16.mxu0 0
  %260 = vmatmul.mubr.bf16.gmra.mrb[0].mxu0 %v212
  %v261 = vpop.f32.mrb[0].mxu0
  %v262 = vadd.f32 %v160, %v261
  %v263 = vpop.f32.mrb[0].mxu0
  %v264 = vpop.f32.mrb[0].mxu0
  %v265 = vadd.f32 %v163, %v264
  %v266 = vpop.f32.mrb[0].mxu0
  %267 = vmatprep.mubr.bf16.mxu0 0
  %268 = vmatmul.mubr.bf16.gmra.mrb[0].mxu0 %v215
  %v269 = vpop.f32.mrb[0].mxu0
  %v270 = vadd.f32 %v168, %v269
  %v271 = vpop.f32.mrb[0].mxu0
  %v272 = vpop.f32.mrb[0].mxu0
  %v273 = vadd.f32 %v171, %v272
  %v274 = vpop.f32.mrb[0].mxu0
  %275 = vmatprep.mubr.bf16.mxu0 0
  %276 = vmatmul.mubr.bf16.gmra.mrb[0].mxu0 %v218
  %v277 = vpop.f32.mrb[0].mxu0
  %v278 = vadd.f32 %v176, %v277
  %v279 = vpop.f32.mrb[0].mxu0
  %v280 = vpop.f32.mrb[0].mxu0
  %v281 = vadd.f32 %v179, %v280
  %v282 = vpop.f32.mrb[0].mxu0
  %283 = vmatprep.mubr.bf16.mxu0 0
  %284 = vmatmul.mubr.bf16.gmra.mrb[0].mxu0 %v221
  %v285 = vpop.f32.mrb[0].mxu0
  %v286 = vadd.f32 %v184, %v285
  %v287 = vpop.f32.mrb[0].mxu0
  %v288 = vpop.f32.mrb[0].mxu0
  %v289 = vadd.f32 %v187, %v288
  %v290 = vpop.f32.mrb[0].mxu0
  %291 = vdwg.mxu0
  %v292 = vld [vmem:[%s5] sm:$0xff]
  %v293 = vld [vmem:[%s5 + $0x8] sm:$0xff]
  %v294 = vld [vmem:[%s5 + $0x10] sm:$0xff]
  %v295 = vld [vmem:[%s5 + $0x18] sm:$0xff]
  %v296 = vld [vmem:[%s5 + $0x20] sm:$0xff]
  %v297 = vld [vmem:[%s5 + $0x28] sm:$0xff]
  %v298 = vld [vmem:[%s5 + $0x30] sm:$0xff]
  %v299 = vld [vmem:[%s5 + $0x38] sm:$0xff]
  %301 = vset.pattern.permute.xlu0 0
  %302 = vperm.xlu0 %301, %v292
  %v303 = vpop.permute.xlu0 %302
  %306 = vset.pattern.permute.xlu0 0
  %307 = vperm.xlu0 %306, %v293
  %v308 = vpop.permute.xlu0 %307
  %311 = vset.pattern.permute.xlu0 0
  %312 = vperm.xlu0 %311, %v294
  %v313 = vpop.permute.xlu0 %312
  %316 = vset.pattern.permute.xlu0 0
  %317 = vperm.xlu0 %316, %v295
  %v318 = vpop.permute.xlu0 %317
  %321 = vset.pattern.permute.xlu0 0
  %322 = vperm.xlu0 %321, %v296
  %v323 = vpop.permute.xlu0 %322
  %326 = vset.pattern.permute.xlu0 0
  %327 = vperm.xlu0 %326, %v297
  %v328 = vpop.permute.xlu0 %327
  %331 = vset.pattern.permute.xlu0 0
  %332 = vperm.xlu0 %331, %v298
  %v333 = vpop.permute.xlu0 %332
  %336 = vset.pattern.permute.xlu0 0
  %337 = vperm.xlu0 %336, %v299
  %v338 = vpop.permute.xlu0 %337
  %v340 = vadd.f32 %v262, %v303
  %v341 = vadd.f32 %v265, %v308
  %v342 = vadd.f32 %v270, %v313
  %v343 = vadd.f32 %v273, %v318
  %v344 = vadd.f32 %v278, %v323
  %v345 = vadd.f32 %v281, %v328
  %v346 = vadd.f32 %v286, %v333
  %v347 = vadd.f32 %v289, %v338
  %v348 = vld [vmem:[%s6] sm:$0xff]
  %v349 = vld [vmem:[%s6 + $0x8] sm:$0xff]
  %v350 = vld [vmem:[%s6 + $0x10] sm:$0xff]
  %v351 = vld [vmem:[%s6 + $0x18] sm:$0xff]
  %v352 = vld [vmem:[%s7] sm:$0xff]
  %v353 = vld [vmem:[%s7 + $0x8] sm:$0xff]
  %v354 = vld [vmem:[%s7 + $0x10] sm:$0xff]
  %v355 = vld [vmem:[%s7 + $0x18] sm:$0xff]
  %v356 = vtanh.pop %v340
  %v357 = vtanh.pop %v341
  %v358 = vtanh.pop %v342
  %v359 = vtanh.pop %v343
  %v360 = vtanh.pop %v344
  %v361 = vtanh.pop %v345
  %v362 = vtanh.pop %v346
  %v363 = vtanh.pop %v347
  %v364 = vmul.f32 %v360, 0.5
  %v365 = vmul.f32 %v361, 0.5
  %v366 = vmul.f32 %v362, 0.5
  %v367 = vmul.f32 %v363, 0.5
  %v368 = vadd.f32 %v364, 0.5
  %v369 = vadd.f32 %v365, 0.5
  %v370 = vadd.f32 %v366, 0.5
  %v371 = vadd.f32 %v367, 0.5
  %v372 = vmul.f32 %v356, %v368
  %v373 = vmul.f32 %v357, %v369
  %v374 = vmul.f32 %v358, %v370
  %v375 = vmul.f32 %v359, %v371
  %v376 = vlaneseq
  %v377 = vshrl.u32 %v376, 7
  %v378 = vsub.s32 0, %v377
  %v379 = vrot.slane %v49, %v378
  %v380 = vmul.f32 %v372, %v379
  %v381 = vmul.f32 %v373, %v379
  %v382 = vmul.f32 %v374, %v379
  %v383 = vmul.f32 %v375, %v379
  %384 = vadd.xlane.f32.xlu0 %v380
  %v385 = vpop.xlane.xlu0 %384
  %386 = vadd.xlane.f32.xlu0 %v381
  %v387 = vpop.xlane.xlu0 %386
  %388 = vadd.xlane.f32.xlu0 %v382
  %v389 = vpop.xlane.xlu0 %388
  %390 = vadd.xlane.f32.xlu0 %v383
  %v391 = vpop.xlane.xlu0 %390
  %v392 = vmul.f32 %v380, %v372
  %v393 = vmul.f32 %v381, %v373
  %v394 = vmul.f32 %v382, %v374
  %v395 = vmul.f32 %v383, %v375
  %396 = vadd.xlane.f32.xlu0 %v392
  %v397 = vpop.xlane.xlu0 %396
  %398 = vadd.xlane.f32.xlu0 %v393
  %v399 = vpop.xlane.xlu0 %398
  %400 = vadd.xlane.f32.xlu0 %v394
  %v401 = vpop.xlane.xlu0 %400
  %402 = vadd.xlane.f32.xlu0 %v395
  %v403 = vpop.xlane.xlu0 %402
  %v404 = vmul.f32 %v385, 0.03125
  %v405 = vmul.f32 %v387, 0.03125
  %v406 = vmul.f32 %v389, 0.03125
  %v407 = vmul.f32 %v391, 0.03125
  %v408 = vmul.f32 %v397, 0.03125
  %v409 = vmul.f32 %v399, 0.03125
  %v410 = vmul.f32 %v401, 0.03125
  %v411 = vmul.f32 %v403, 0.03125
  %v412 = vmul.f32 %v404, %v404
  %v413 = vmul.f32 %v405, %v405
  %v414 = vmul.f32 %v406, %v406
  %v415 = vmul.f32 %v407, %v407
  %v416 = vsub.f32 %v408, %v412
  %v417 = vsub.f32 %v409, %v413
  %v418 = vsub.f32 %v410, %v414
  %v419 = vsub.f32 %v411, %v415
  %v420 = vadd.f32 %v416, 1e-05
  %v421 = vadd.f32 %v417, 1e-05
  %v422 = vadd.f32 %v418, 1e-05
  %v423 = vadd.f32 %v419, 1e-05
  %v424 = vrsqrt.pop %v420
  %v425 = vrsqrt.pop %v421
  %v426 = vrsqrt.pop %v422
  %v427 = vrsqrt.pop %v423
  %v428 = vmul.f32 %v348, %v424
  %v429 = vmul.f32 %v349, %v425
  %v430 = vmul.f32 %v350, %v426
  %v431 = vmul.f32 %v351, %v427
  %v432 = vmul.f32 %v404, %v428
  %v433 = vmul.f32 %v405, %v429
  %v434 = vmul.f32 %v406, %v430
  %v435 = vmul.f32 %v407, %v431
  %v436 = vsub.f32 %v352, %v432
  %v437 = vsub.f32 %v353, %v433
  %v438 = vsub.f32 %v354, %v434
  %v439 = vsub.f32 %v355, %v435
  %441 = vset.pattern.permute.xlu0 0
  %442 = vperm.xlu0 %441, %v428
  %v443 = vpop.permute.xlu0 %442
  %446 = vset.pattern.permute.xlu0 0
  %447 = vperm.xlu0 %446, %v429
  %v448 = vpop.permute.xlu0 %447
  %451 = vset.pattern.permute.xlu0 0
  %452 = vperm.xlu0 %451, %v430
  %v453 = vpop.permute.xlu0 %452
  %456 = vset.pattern.permute.xlu0 0
  %457 = vperm.xlu0 %456, %v431
  %v458 = vpop.permute.xlu0 %457
  %v460 = vmul.f32 %v372, %v443
  %v461 = vmul.f32 %v373, %v448
  %v462 = vmul.f32 %v374, %v453
  %v463 = vmul.f32 %v375, %v458
  %465 = vset.pattern.permute.xlu0 0
  %466 = vperm.xlu0 %465, %v436
  %v467 = vpop.permute.xlu0 %466
  %470 = vset.pattern.permute.xlu0 0
  %471 = vperm.xlu0 %470, %v437
  %v472 = vpop.permute.xlu0 %471
  %475 = vset.pattern.permute.xlu0 0
  %476 = vperm.xlu0 %475, %v438
  %v477 = vpop.permute.xlu0 %476
  %480 = vset.pattern.permute.xlu0 0
  %481 = vperm.xlu0 %480, %v439
  %v482 = vpop.permute.xlu0 %481
  %v484 = vadd.f32 %v460, %v467
  %v485 = vadd.f32 %v461, %v472
  %v486 = vadd.f32 %v462, %v477
  %v487 = vadd.f32 %v463, %v482
  %488 = vst [vmem:[#allocation2] sm:$0xff] %v484
  %489 = vst [vmem:[#allocation2 + $0x8] sm:$0xff] %v485
  %490 = vst [vmem:[#allocation2 + $0x10] sm:$0xff] %v486
  %491 = vst [vmem:[#allocation2 + $0x18] sm:$0xff] %v487
  %v492 = vld [vmem:[#allocation2] sm:$0xff]
  %v493 = vld [vmem:[#allocation2 + $0x8] sm:$0xff]
  %v494 = vld [vmem:[#allocation2 + $0x10] sm:$0xff]
  %v495 = vld [vmem:[#allocation2 + $0x18] sm:$0xff]
  %496 = vrot.lane.b32.xlu0 %v492, 1
  %v497 = vpop.permute.xlu0 %496
  %498 = vrot.lane.b32.xlu0 %v493, 1
  %v499 = vpop.permute.xlu0 %498
  %500 = vrot.lane.b32.xlu0 %v494, 1
  %v501 = vpop.permute.xlu0 %500
  %502 = vrot.lane.b32.xlu0 %v495, 1
  %v503 = vpop.permute.xlu0 %502
  %v504 = vmul.f32 %v497, %v65
  %v505 = vmul.f32 %v499, %v65
  %v506 = vmul.f32 %v501, %v65
  %v507 = vmul.f32 %v503, %v65
  %v508 = vpack.c.bf16 %v505, %v504
  %v509 = vpack.c.bf16 %v507, %v506
  %510 = vst [vmem:[#allocation3] sm:$0xff] %v508
  %511 = vst [vmem:[#allocation3 + $0x8] sm:$0xff] %v509
  %v512 = vpack.c.bf16 %v493, %v492
  %v513 = vpack.c.bf16 %v495, %v494
  %514 = vst [vmem:[#allocation3 + $0x10] sm:$0xff] %v512
  %515 = vst [vmem:[#allocation3 + $0x18] sm:$0xff] %v513
  %v516 = vld [vmem:[%s8] sm:$0xf]
  %v517 = vld [vmem:[%s8 + $0x4] sm:$0xf]
  %v518 = vld [vmem:[%s8 + $0x8] sm:$0xf]
  %v519 = vld [vmem:[%s8 + $0xc] sm:$0xf]
  %v520 = vld [vmem:[%s8 + $0x10] sm:$0xf]
  %v521 = vld [vmem:[%s8 + $0x14] sm:$0xf]
  %v522 = vld [vmem:[%s8 + $0x18] sm:$0xf]
  %v523 = vld [vmem:[%s8 + $0x1c] sm:$0xf]
  %v524 = vld [vmem:[#allocation3] sm:$0xff]
  %v525 = vld [vmem:[#allocation3 + $0x8] sm:$0xff]
  %v526 = vld [vmem:[#allocation3 + $0x10] sm:$0xff]
  %v527 = vld [vmem:[#allocation3 + $0x18] sm:$0xff]
  %v528 = vld [vmem:[#allocation3 + $0x20] sm:$0xff]
  %v529 = vld [vmem:[%s9] sm:$0xff]
  %v530 = vld [vmem:[%s9 + $0x8] sm:$0xff]
  %v531 = vld [vmem:[%s9 + $0x10] sm:$0xff]
  %v532 = vld [vmem:[%s9 + $0x18] sm:$0xff]
  %v533 = vld [vmem:[%s9 + $0x20] sm:$0xff]
  %v534 = vld [vmem:[%s9 + $0x28] sm:$0xff]
  %v535 = vld [vmem:[%s9 + $0x30] sm:$0xff]
  %v536 = vld [vmem:[%s9 + $0x38] sm:$0xff]
  %538 = vset.pattern.permute.xlu0 0
  %539 = vperm.xlu0 %538, %v529
  %v540 = vpop.permute.xlu0 %539
  %543 = vset.pattern.permute.xlu0 0
  %544 = vperm.xlu0 %543, %v530
  %v545 = vpop.permute.xlu0 %544
  %548 = vset.pattern.permute.xlu0 0
  %549 = vperm.xlu0 %548, %v531
  %v550 = vpop.permute.xlu0 %549
  %553 = vset.pattern.permute.xlu0 0
  %554 = vperm.xlu0 %553, %v532
  %v555 = vpop.permute.xlu0 %554
  %558 = vset.pattern.permute.xlu0 0
  %559 = vperm.xlu0 %558, %v533
  %v560 = vpop.permute.xlu0 %559
  %563 = vset.pattern.permute.xlu0 0
  %564 = vperm.xlu0 %563, %v534
  %v565 = vpop.permute.xlu0 %564
  %568 = vset.pattern.permute.xlu0 0
  %569 = vperm.xlu0 %568, %v535
  %v570 = vpop.permute.xlu0 %569
  %573 = vset.pattern.permute.xlu0 0
  %574 = vperm.xlu0 %573, %v536
  %v575 = vpop.permute.xlu0 %574
  %v585 = vunpack.c.l.b16 %v516
  %v586 = vunpack.c.l.b16 %v517
  %v587 = vunpack.c.l.b16 %v518
  %v588 = vunpack.c.l.b16 %v519
  %v589 = vunpack.c.l.b16 %v520
  %v590 = vunpack.c.l.b16 %v521
  %v591 = vunpack.c.l.b16 %v522
  %v592 = vunpack.c.l.b16 %v523
  %v593 = vpack.c.b16 %v586, %v585
  %v594 = vpack.c.b16 %v588, %v587
  %v595 = vpack.c.b16 %v590, %v589
  %v596 = vpack.c.b16 %v592, %v591
  %vm597 = vcmask 654336
  %v599 = vsel %vm597, %v593, 0
  %v602 = vsel %vm597, %v594, 0
  %v605 = vsel %vm597, %v595, 0
  %v608 = vsel %vm597, %v596, 0
  %610 = vmatprep.subr.bf16.mxu0 0
  %611 = vmatpush1.bf16.msra.mxu0 %v524
  %612 = vmatprep.subr.bf16.mxu0 0
  %613 = vmatpush1.bf16.msra.mxu0 %v525
  %614 = vmatprep.subr.bf16.mxu0 0
  %615 = vmatpush1.bf16.msra.mxu0 %v526
  %616 = vmatprep.subr.bf16.mxu0 0
  %617 = vmatpush1.bf16.msra.mxu0 %v527
  %618 = vmatprep.subr.bf16.mxu0 0
  %619 = vmatpush1.bf16.msra.mxu0 %v528
  %620 = vmatprep.subr.bf16.mxu0 0
  %621 = vmatpush1.bf16.msra.mxu0 0
  %622 = vmatprep.subr.bf16.mxu0 0
  %623 = vmatpush1.bf16.msra.mxu0 0
  %624 = vmatprep.subr.bf16.mxu0 0
  %625 = vmatpush1.bf16.msra.mxu0 0
  %626 = vmatprep.subr.bf16.mxu0 0
  %627 = vmatpush1.bf16.msra.mxu0 0
  %628 = vmatprep.subr.bf16.mxu0 0
  %629 = vmatpush1.bf16.msra.mxu0 0
  %630 = vmatprep.subr.bf16.mxu0 0
  %631 = vmatpush1.bf16.msra.mxu0 0
  %632 = vmatprep.subr.bf16.mxu0 0
  %633 = vmatpush1.bf16.msra.mxu0 0
  %634 = vmatprep.subr.bf16.mxu0 0
  %635 = vmatpush1.bf16.msra.mxu0 0
  %636 = vmatprep.subr.bf16.mxu0 0
  %637 = vmatpush1.bf16.msra.mxu0 0
  %638 = vmatprep.subr.bf16.mxu0 0
  %639 = vmatpush1.bf16.msra.mxu0 0
  %640 = vmatprep.subr.bf16.mxu0 0
  %641 = vmatpush1.bf16.msra.mxu0 0
  %642 = vmatprep.mubr.bf16.mxu0 0
  %643 = vmatmul.mubr.bf16.gmra.mrb[0].mxu0 %v599
  %v644 = vpop.f32.mrb[0].mxu0
  %v645 = vadd.f32 %v540, %v644
  %v646 = vpop.f32.mrb[0].mxu0
  %v647 = vpop.f32.mrb[0].mxu0
  %v648 = vadd.f32 %v545, %v647
  %v649 = vpop.f32.mrb[0].mxu0
  %650 = vmatprep.mubr.bf16.mxu0 0
  %651 = vmatmul.mubr.bf16.gmra.mrb[0].mxu0 %v602
  %v652 = vpop.f32.mrb[0].mxu0
  %v653 = vadd.f32 %v550, %v652
  %v654 = vpop.f32.mrb[0].mxu0
  %v655 = vpop.f32.mrb[0].mxu0
  %v656 = vadd.f32 %v555, %v655
  %v657 = vpop.f32.mrb[0].mxu0
  %658 = vmatprep.mubr.bf16.mxu0 0
  %659 = vmatmul.mubr.bf16.gmra.mrb[0].mxu0 %v605
  %v660 = vpop.f32.mrb[0].mxu0
  %v661 = vadd.f32 %v560, %v660
  %v662 = vpop.f32.mrb[0].mxu0
  %v663 = vpop.f32.mrb[0].mxu0
  %v664 = vadd.f32 %v565, %v663
  %v665 = vpop.f32.mrb[0].mxu0
  %666 = vmatprep.mubr.bf16.mxu0 0
  %667 = vmatmul.mubr.bf16.gmra.mrb[0].mxu0 %v608
  %v668 = vpop.f32.mrb[0].mxu0
  %v669 = vadd.f32 %v570, %v668
  %v670 = vpop.f32.mrb[0].mxu0
  %v671 = vpop.f32.mrb[0].mxu0
  %v672 = vadd.f32 %v575, %v671
  %v673 = vpop.f32.mrb[0].mxu0
  %674 = vdwg.mxu0
  %v675 = vld [vmem:[%s10] sm:$0xff]
  %v676 = vld [vmem:[%s10 + $0x8] sm:$0xff]
  %v677 = vld [vmem:[%s10 + $0x10] sm:$0xff]
  %v678 = vld [vmem:[%s10 + $0x18] sm:$0xff]
  %v679 = vld [vmem:[%s11] sm:$0xff]
  %v680 = vld [vmem:[%s11 + $0x8] sm:$0xff]
  %v681 = vld [vmem:[%s11 + $0x10] sm:$0xff]
  %v682 = vld [vmem:[%s11 + $0x18] sm:$0xff]
  %v683 = vtanh.pop %v645
  %v684 = vtanh.pop %v648
  %v685 = vtanh.pop %v653
  %v686 = vtanh.pop %v656
  %v687 = vtanh.pop %v661
  %v688 = vtanh.pop %v664
  %v689 = vtanh.pop %v669
  %v690 = vtanh.pop %v672
  %v691 = vmul.f32 %v687, 0.5
  %v692 = vmul.f32 %v688, 0.5
  %v693 = vmul.f32 %v689, 0.5
  %v694 = vmul.f32 %v690, 0.5
  %v695 = vadd.f32 %v691, 0.5
  %v696 = vadd.f32 %v692, 0.5
  %v697 = vadd.f32 %v693, 0.5
  %v698 = vadd.f32 %v694, 0.5
  %v699 = vmul.f32 %v683, %v695
  %v700 = vmul.f32 %v684, %v696
  %v701 = vmul.f32 %v685, %v697
  %v702 = vmul.f32 %v686, %v698
  %v703 = vmul.f32 %v699, %v379
  %v704 = vmul.f32 %v700, %v379
  %v705 = vmul.f32 %v701, %v379
  %v706 = vmul.f32 %v702, %v379
  %707 = vadd.xlane.f32.xlu0 %v703
  %v708 = vpop.xlane.xlu0 %707
  %709 = vadd.xlane.f32.xlu0 %v704
  %v710 = vpop.xlane.xlu0 %709
  %711 = vadd.xlane.f32.xlu0 %v705
  %v712 = vpop.xlane.xlu0 %711
  %713 = vadd.xlane.f32.xlu0 %v706
  %v714 = vpop.xlane.xlu0 %713
  %v715 = vmul.f32 %v703, %v699
  %v716 = vmul.f32 %v704, %v700
  %v717 = vmul.f32 %v705, %v701
  %v718 = vmul.f32 %v706, %v702
  %719 = vadd.xlane.f32.xlu0 %v715
  %v720 = vpop.xlane.xlu0 %719
  %721 = vadd.xlane.f32.xlu0 %v716
  %v722 = vpop.xlane.xlu0 %721
  %723 = vadd.xlane.f32.xlu0 %v717
  %v724 = vpop.xlane.xlu0 %723
  %725 = vadd.xlane.f32.xlu0 %v718
  %v726 = vpop.xlane.xlu0 %725
  %v727 = vmul.f32 %v708, 0.03125
  %v728 = vmul.f32 %v710, 0.03125
  %v729 = vmul.f32 %v712, 0.03125
  %v730 = vmul.f32 %v714, 0.03125
  %v731 = vmul.f32 %v720, 0.03125
  %v732 = vmul.f32 %v722, 0.03125
  %v733 = vmul.f32 %v724, 0.03125
  %v734 = vmul.f32 %v726, 0.03125
  %v735 = vmul.f32 %v727, %v727
  %v736 = vmul.f32 %v728, %v728
  %v737 = vmul.f32 %v729, %v729
  %v738 = vmul.f32 %v730, %v730
  %v739 = vsub.f32 %v731, %v735
  %v740 = vsub.f32 %v732, %v736
  %v741 = vsub.f32 %v733, %v737
  %v742 = vsub.f32 %v734, %v738
  %v743 = vadd.f32 %v739, 1e-05
  %v744 = vadd.f32 %v740, 1e-05
  %v745 = vadd.f32 %v741, 1e-05
  %v746 = vadd.f32 %v742, 1e-05
  %v747 = vrsqrt.pop %v743
  %v748 = vrsqrt.pop %v744
  %v749 = vrsqrt.pop %v745
  %v750 = vrsqrt.pop %v746
  %v751 = vmul.f32 %v675, %v747
  %v752 = vmul.f32 %v676, %v748
  %v753 = vmul.f32 %v677, %v749
  %v754 = vmul.f32 %v678, %v750
  %v755 = vmul.f32 %v727, %v751
  %v756 = vmul.f32 %v728, %v752
  %v757 = vmul.f32 %v729, %v753
  %v758 = vmul.f32 %v730, %v754
  %v759 = vsub.f32 %v679, %v755
  %v760 = vsub.f32 %v680, %v756
  %v761 = vsub.f32 %v681, %v757
  %v762 = vsub.f32 %v682, %v758
  %764 = vset.pattern.permute.xlu0 0
  %765 = vperm.xlu0 %764, %v751
  %v766 = vpop.permute.xlu0 %765
  %769 = vset.pattern.permute.xlu0 0
  %770 = vperm.xlu0 %769, %v752
  %v771 = vpop.permute.xlu0 %770
  %774 = vset.pattern.permute.xlu0 0
  %775 = vperm.xlu0 %774, %v753
  %v776 = vpop.permute.xlu0 %775
  %779 = vset.pattern.permute.xlu0 0
  %780 = vperm.xlu0 %779, %v754
  %v781 = vpop.permute.xlu0 %780
  %v783 = vmul.f32 %v699, %v766
  %v784 = vmul.f32 %v700, %v771
  %v785 = vmul.f32 %v701, %v776
  %v786 = vmul.f32 %v702, %v781
  %788 = vset.pattern.permute.xlu0 0
  %789 = vperm.xlu0 %788, %v759
  %v790 = vpop.permute.xlu0 %789
  %793 = vset.pattern.permute.xlu0 0
  %794 = vperm.xlu0 %793, %v760
  %v795 = vpop.permute.xlu0 %794
  %798 = vset.pattern.permute.xlu0 0
  %799 = vperm.xlu0 %798, %v761
  %v800 = vpop.permute.xlu0 %799
  %803 = vset.pattern.permute.xlu0 0
  %804 = vperm.xlu0 %803, %v762
  %v805 = vpop.permute.xlu0 %804
  %v807 = vadd.f32 %v783, %v790
  %v808 = vadd.f32 %v784, %v795
  %v809 = vadd.f32 %v785, %v800
  %v810 = vadd.f32 %v786, %v805
  %v811 = vadd.f32 %v807, %v492
  %v812 = vadd.f32 %v808, %v493
  %v813 = vadd.f32 %v809, %v494
  %v814 = vadd.f32 %v810, %v495
  %815 = vst [vmem:[#allocation2] sm:$0xff] %v811
  %816 = vst [vmem:[#allocation2 + $0x8] sm:$0xff] %v812
  %817 = vst [vmem:[#allocation2 + $0x10] sm:$0xff] %v813
  %818 = vst [vmem:[#allocation2 + $0x18] sm:$0xff] %v814
  %v819 = vld [vmem:[#allocation2] sm:$0xff]
  %v820 = vld [vmem:[#allocation2 + $0x8] sm:$0xff]
  %v821 = vld [vmem:[#allocation2 + $0x10] sm:$0xff]
  %v822 = vld [vmem:[#allocation2 + $0x18] sm:$0xff]
  %823 = vrot.lane.b32.xlu0 %v819, 1
  %v824 = vpop.permute.xlu0 %823
  %825 = vrot.lane.b32.xlu0 %v820, 1
  %v826 = vpop.permute.xlu0 %825
  %827 = vrot.lane.b32.xlu0 %v821, 1
  %v828 = vpop.permute.xlu0 %827
  %829 = vrot.lane.b32.xlu0 %v822, 1
  %v830 = vpop.permute.xlu0 %829
  %v831 = vmul.f32 %v824, %v65
  %v832 = vmul.f32 %v826, %v65
  %v833 = vmul.f32 %v828, %v65
  %v834 = vmul.f32 %v830, %v65
  %v835 = vpack.c.bf16 %v832, %v831
  %v836 = vpack.c.bf16 %v834, %v833
  %837 = vst [vmem:[#allocation3] sm:$0xff] %v835
  %838 = vst [vmem:[#allocation3 + $0x8] sm:$0xff] %v836
  %v839 = vpack.c.bf16 %v820, %v819
  %v840 = vpack.c.bf16 %v822, %v821
  %841 = vst [vmem:[#allocation3 + $0x10] sm:$0xff] %v839
  %842 = vst [vmem:[#allocation3 + $0x18] sm:$0xff] %v840
  %s843 = scalar_lea.vmem %s8, 32
  %v844 = vld [vmem:[%s843] sm:$0xf]
  %v845 = vld [vmem:[%s843 + $0x4] sm:$0xf]
  %v846 = vld [vmem:[%s843 + $0x8] sm:$0xf]
  %v847 = vld [vmem:[%s843 + $0xc] sm:$0xf]
  %v848 = vld [vmem:[%s843 + $0x10] sm:$0xf]
  %v849 = vld [vmem:[%s843 + $0x14] sm:$0xf]
  %v850 = vld [vmem:[%s843 + $0x18] sm:$0xf]
  %v851 = vld [vmem:[%s843 + $0x1c] sm:$0xf]
  %v852 = vld [vmem:[#allocation3] sm:$0xff]
  %v853 = vld [vmem:[#allocation3 + $0x8] sm:$0xff]
  %v854 = vld [vmem:[#allocation3 + $0x10] sm:$0xff]
  %v855 = vld [vmem:[#allocation3 + $0x18] sm:$0xff]
  %v856 = vld [vmem:[#allocation3 + $0x20] sm:$0xff]
  %s857 = scalar_lea.vmem %s9, 64
  %v858 = vld [vmem:[%s857] sm:$0xff]
  %v859 = vld [vmem:[%s857 + $0x8] sm:$0xff]
  %v860 = vld [vmem:[%s857 + $0x10] sm:$0xff]
  %v861 = vld [vmem:[%s857 + $0x18] sm:$0xff]
  %v862 = vld [vmem:[%s857 + $0x20] sm:$0xff]
  %v863 = vld [vmem:[%s857 + $0x28] sm:$0xff]
  %v864 = vld [vmem:[%s857 + $0x30] sm:$0xff]
  %v865 = vld [vmem:[%s857 + $0x38] sm:$0xff]
  %867 = vset.pattern.permute.xlu0 0
  %868 = vperm.xlu0 %867, %v858
  %v869 = vpop.permute.xlu0 %868
  %872 = vset.pattern.permute.xlu0 0
  %873 = vperm.xlu0 %872, %v859
  %v874 = vpop.permute.xlu0 %873
  %877 = vset.pattern.permute.xlu0 0
  %878 = vperm.xlu0 %877, %v860
  %v879 = vpop.permute.xlu0 %878
  %882 = vset.pattern.permute.xlu0 0
  %883 = vperm.xlu0 %882, %v861
  %v884 = vpop.permute.xlu0 %883
  %887 = vset.pattern.permute.xlu0 0
  %888 = vperm.xlu0 %887, %v862
  %v889 = vpop.permute.xlu0 %888
  %892 = vset.pattern.permute.xlu0 0
  %893 = vperm.xlu0 %892, %v863
  %v894 = vpop.permute.xlu0 %893
  %897 = vset.pattern.permute.xlu0 0
  %898 = vperm.xlu0 %897, %v864
  %v899 = vpop.permute.xlu0 %898
  %902 = vset.pattern.permute.xlu0 0
  %903 = vperm.xlu0 %902, %v865
  %v904 = vpop.permute.xlu0 %903
  %v914 = vunpack.c.l.b16 %v844
  %v915 = vunpack.c.l.b16 %v845
  %v916 = vunpack.c.l.b16 %v846
  %v917 = vunpack.c.l.b16 %v847
  %v918 = vunpack.c.l.b16 %v848
  %v919 = vunpack.c.l.b16 %v849
  %v920 = vunpack.c.l.b16 %v850
  %v921 = vunpack.c.l.b16 %v851
  %v922 = vpack.c.b16 %v915, %v914
  %v923 = vpack.c.b16 %v917, %v916
  %v924 = vpack.c.b16 %v919, %v918
  %v925 = vpack.c.b16 %v921, %v920
  %v927 = vsel %vm597, %v922, 0
  %v930 = vsel %vm597, %v923, 0
  %v933 = vsel %vm597, %v924, 0
  %v936 = vsel %vm597, %v925, 0
  %938 = vmatprep.subr.bf16.mxu0 0
  %939 = vmatpush1.bf16.msra.mxu0 %v852
  %940 = vmatprep.subr.bf16.mxu0 0
  %941 = vmatpush1.bf16.msra.mxu0 %v853
  %942 = vmatprep.subr.bf16.mxu0 0
  %943 = vmatpush1.bf16.msra.mxu0 %v854
  %944 = vmatprep.subr.bf16.mxu0 0
  %945 = vmatpush1.bf16.msra.mxu0 %v855
  %946 = vmatprep.subr.bf16.mxu0 0
  %947 = vmatpush1.bf16.msra.mxu0 %v856
  %948 = vmatprep.subr.bf16.mxu0 0
  %949 = vmatpush1.bf16.msra.mxu0 0
  %950 = vmatprep.subr.bf16.mxu0 0
  %951 = vmatpush1.bf16.msra.mxu0 0
  %952 = vmatprep.subr.bf16.mxu0 0
  %953 = vmatpush1.bf16.msra.mxu0 0
  %954 = vmatprep.subr.bf16.mxu0 0
  %955 = vmatpush1.bf16.msra.mxu0 0
  %956 = vmatprep.subr.bf16.mxu0 0
  %957 = vmatpush1.bf16.msra.mxu0 0
  %958 = vmatprep.subr.bf16.mxu0 0
  %959 = vmatpush1.bf16.msra.mxu0 0
  %960 = vmatprep.subr.bf16.mxu0 0
  %961 = vmatpush1.bf16.msra.mxu0 0
  %962 = vmatprep.subr.bf16.mxu0 0
  %963 = vmatpush1.bf16.msra.mxu0 0
  %964 = vmatprep.subr.bf16.mxu0 0
  %965 = vmatpush1.bf16.msra.mxu0 0
  %966 = vmatprep.subr.bf16.mxu0 0
  %967 = vmatpush1.bf16.msra.mxu0 0
  %968 = vmatprep.subr.bf16.mxu0 0
  %969 = vmatpush1.bf16.msra.mxu0 0
  %970 = vmatprep.mubr.bf16.mxu0 0
  %971 = vmatmul.mubr.bf16.gmra.mrb[0].mxu0 %v927
  %v972 = vpop.f32.mrb[0].mxu0
  %v973 = vadd.f32 %v869, %v972
  %v974 = vpop.f32.mrb[0].mxu0
  %v975 = vpop.f32.mrb[0].mxu0
  %v976 = vadd.f32 %v874, %v975
  %v977 = vpop.f32.mrb[0].mxu0
  %978 = vmatprep.mubr.bf16.mxu0 0
  %979 = vmatmul.mubr.bf16.gmra.mrb[0].mxu0 %v930
  %v980 = vpop.f32.mrb[0].mxu0
  %v981 = vadd.f32 %v879, %v980
  %v982 = vpop.f32.mrb[0].mxu0
  %v983 = vpop.f32.mrb[0].mxu0
  %v984 = vadd.f32 %v884, %v983
  %v985 = vpop.f32.mrb[0].mxu0
  %986 = vmatprep.mubr.bf16.mxu0 0
  %987 = vmatmul.mubr.bf16.gmra.mrb[0].mxu0 %v933
  %v988 = vpop.f32.mrb[0].mxu0
  %v989 = vadd.f32 %v889, %v988
  %v990 = vpop.f32.mrb[0].mxu0
  %v991 = vpop.f32.mrb[0].mxu0
  %v992 = vadd.f32 %v894, %v991
  %v993 = vpop.f32.mrb[0].mxu0
  %994 = vmatprep.mubr.bf16.mxu0 0
  %995 = vmatmul.mubr.bf16.gmra.mrb[0].mxu0 %v936
  %v996 = vpop.f32.mrb[0].mxu0
  %v997 = vadd.f32 %v899, %v996
  %v998 = vpop.f32.mrb[0].mxu0
  %v999 = vpop.f32.mrb[0].mxu0
  %v1000 = vadd.f32 %v904, %v999
  %v1001 = vpop.f32.mrb[0].mxu0
  %1002 = vdwg.mxu0
  %s1003 = scalar_lea.vmem %s10, 32
  %v1004 = vld [vmem:[%s1003] sm:$0xff]
  %v1005 = vld [vmem:[%s1003 + $0x8] sm:$0xff]
  %v1006 = vld [vmem:[%s1003 + $0x10] sm:$0xff]
  %v1007 = vld [vmem:[%s1003 + $0x18] sm:$0xff]
  %s1008 = scalar_lea.vmem %s11, 32
  %v1009 = vld [vmem:[%s1008] sm:$0xff]
  %v1010 = vld [vmem:[%s1008 + $0x8] sm:$0xff]
  %v1011 = vld [vmem:[%s1008 + $0x10] sm:$0xff]
  %v1012 = vld [vmem:[%s1008 + $0x18] sm:$0xff]
  %v1013 = vtanh.pop %v973
  %v1014 = vtanh.pop %v976
  %v1015 = vtanh.pop %v981
  %v1016 = vtanh.pop %v984
  %v1017 = vtanh.pop %v989
  %v1018 = vtanh.pop %v992
  %v1019 = vtanh.pop %v997
  %v1020 = vtanh.pop %v1000
  %v1021 = vmul.f32 %v1017, 0.5
  %v1022 = vmul.f32 %v1018, 0.5
  %v1023 = vmul.f32 %v1019, 0.5
  %v1024 = vmul.f32 %v1020, 0.5
  %v1025 = vadd.f32 %v1021, 0.5
  %v1026 = vadd.f32 %v1022, 0.5
  %v1027 = vadd.f32 %v1023, 0.5
  %v1028 = vadd.f32 %v1024, 0.5
  %v1029 = vmul.f32 %v1013, %v1025
  %v1030 = vmul.f32 %v1014, %v1026
  %v1031 = vmul.f32 %v1015, %v1027
  %v1032 = vmul.f32 %v1016, %v1028
  %v1033 = vmul.f32 %v1029, %v379
  %v1034 = vmul.f32 %v1030, %v379
  %v1035 = vmul.f32 %v1031, %v379
  %v1036 = vmul.f32 %v1032, %v379
  %1037 = vadd.xlane.f32.xlu0 %v1033
  %v1038 = vpop.xlane.xlu0 %1037
  %1039 = vadd.xlane.f32.xlu0 %v1034
  %v1040 = vpop.xlane.xlu0 %1039
  %1041 = vadd.xlane.f32.xlu0 %v1035
  %v1042 = vpop.xlane.xlu0 %1041
  %1043 = vadd.xlane.f32.xlu0 %v1036
  %v1044 = vpop.xlane.xlu0 %1043
  %v1045 = vmul.f32 %v1033, %v1029
  %v1046 = vmul.f32 %v1034, %v1030
  %v1047 = vmul.f32 %v1035, %v1031
  %v1048 = vmul.f32 %v1036, %v1032
  %1049 = vadd.xlane.f32.xlu0 %v1045
  %v1050 = vpop.xlane.xlu0 %1049
  %1051 = vadd.xlane.f32.xlu0 %v1046
  %v1052 = vpop.xlane.xlu0 %1051
  %1053 = vadd.xlane.f32.xlu0 %v1047
  %v1054 = vpop.xlane.xlu0 %1053
  %1055 = vadd.xlane.f32.xlu0 %v1048
  %v1056 = vpop.xlane.xlu0 %1055
  %v1057 = vmul.f32 %v1038, 0.03125
  %v1058 = vmul.f32 %v1040, 0.03125
  %v1059 = vmul.f32 %v1042, 0.03125
  %v1060 = vmul.f32 %v1044, 0.03125
  %v1061 = vmul.f32 %v1050, 0.03125
  %v1062 = vmul.f32 %v1052, 0.03125
  %v1063 = vmul.f32 %v1054, 0.03125
  %v1064 = vmul.f32 %v1056, 0.03125
  %v1065 = vmul.f32 %v1057, %v1057
  %v1066 = vmul.f32 %v1058, %v1058
  %v1067 = vmul.f32 %v1059, %v1059
  %v1068 = vmul.f32 %v1060, %v1060
  %v1069 = vsub.f32 %v1061, %v1065
  %v1070 = vsub.f32 %v1062, %v1066
  %v1071 = vsub.f32 %v1063, %v1067
  %v1072 = vsub.f32 %v1064, %v1068
  %v1073 = vadd.f32 %v1069, 1e-05
  %v1074 = vadd.f32 %v1070, 1e-05
  %v1075 = vadd.f32 %v1071, 1e-05
  %v1076 = vadd.f32 %v1072, 1e-05
  %v1077 = vrsqrt.pop %v1073
  %v1078 = vrsqrt.pop %v1074
  %v1079 = vrsqrt.pop %v1075
  %v1080 = vrsqrt.pop %v1076
  %v1081 = vmul.f32 %v1004, %v1077
  %v1082 = vmul.f32 %v1005, %v1078
  %v1083 = vmul.f32 %v1006, %v1079
  %v1084 = vmul.f32 %v1007, %v1080
  %v1085 = vmul.f32 %v1057, %v1081
  %v1086 = vmul.f32 %v1058, %v1082
  %v1087 = vmul.f32 %v1059, %v1083
  %v1088 = vmul.f32 %v1060, %v1084
  %v1089 = vsub.f32 %v1009, %v1085
  %v1090 = vsub.f32 %v1010, %v1086
  %v1091 = vsub.f32 %v1011, %v1087
  %v1092 = vsub.f32 %v1012, %v1088
  %1094 = vset.pattern.permute.xlu0 0
  %1095 = vperm.xlu0 %1094, %v1081
  %v1096 = vpop.permute.xlu0 %1095
  %1099 = vset.pattern.permute.xlu0 0
  %1100 = vperm.xlu0 %1099, %v1082
  %v1101 = vpop.permute.xlu0 %1100
  %1104 = vset.pattern.permute.xlu0 0
  %1105 = vperm.xlu0 %1104, %v1083
  %v1106 = vpop.permute.xlu0 %1105
  %1109 = vset.pattern.permute.xlu0 0
  %1110 = vperm.xlu0 %1109, %v1084
  %v1111 = vpop.permute.xlu0 %1110
  %v1113 = vmul.f32 %v1029, %v1096
  %v1114 = vmul.f32 %v1030, %v1101
  %v1115 = vmul.f32 %v1031, %v1106
  %v1116 = vmul.f32 %v1032, %v1111
  %1118 = vset.pattern.permute.xlu0 0
  %1119 = vperm.xlu0 %1118, %v1089
  %v1120 = vpop.permute.xlu0 %1119
  %1123 = vset.pattern.permute.xlu0 0
  %1124 = vperm.xlu0 %1123, %v1090
  %v1125 = vpop.permute.xlu0 %1124
  %1128 = vset.pattern.permute.xlu0 0
  %1129 = vperm.xlu0 %1128, %v1091
  %v1130 = vpop.permute.xlu0 %1129
  %1133 = vset.pattern.permute.xlu0 0
  %1134 = vperm.xlu0 %1133, %v1092
  %v1135 = vpop.permute.xlu0 %1134
  %v1137 = vadd.f32 %v1113, %v1120
  %v1138 = vadd.f32 %v1114, %v1125
  %v1139 = vadd.f32 %v1115, %v1130
  %v1140 = vadd.f32 %v1116, %v1135
  %v1141 = vadd.f32 %v1137, %v819
  %v1142 = vadd.f32 %v1138, %v820
  %v1143 = vadd.f32 %v1139, %v821
  %v1144 = vadd.f32 %v1140, %v822
  %1145 = vst [vmem:[#allocation2] sm:$0xff] %v1141
  %1146 = vst [vmem:[#allocation2 + $0x8] sm:$0xff] %v1142
  %1147 = vst [vmem:[#allocation2 + $0x10] sm:$0xff] %v1143
  %1148 = vst [vmem:[#allocation2 + $0x18] sm:$0xff] %v1144
  %v1149 = vld [vmem:[#allocation2] sm:$0xff]
  %v1150 = vld [vmem:[#allocation2 + $0x8] sm:$0xff]
  %v1151 = vld [vmem:[#allocation2 + $0x10] sm:$0xff]
  %v1152 = vld [vmem:[#allocation2 + $0x18] sm:$0xff]
  %1153 = vrot.lane.b32.xlu0 %v1149, 1
  %v1154 = vpop.permute.xlu0 %1153
  %1155 = vrot.lane.b32.xlu0 %v1150, 1
  %v1156 = vpop.permute.xlu0 %1155
  %1157 = vrot.lane.b32.xlu0 %v1151, 1
  %v1158 = vpop.permute.xlu0 %1157
  %1159 = vrot.lane.b32.xlu0 %v1152, 1
  %v1160 = vpop.permute.xlu0 %1159
  %v1161 = vmul.f32 %v1154, %v65
  %v1162 = vmul.f32 %v1156, %v65
  %v1163 = vmul.f32 %v1158, %v65
  %v1164 = vmul.f32 %v1160, %v65
  %v1165 = vpack.c.bf16 %v1162, %v1161
  %v1166 = vpack.c.bf16 %v1164, %v1163
  %1167 = vst [vmem:[#allocation3] sm:$0xff] %v1165
  %1168 = vst [vmem:[#allocation3 + $0x8] sm:$0xff] %v1166
  %v1169 = vpack.c.bf16 %v1150, %v1149
  %v1170 = vpack.c.bf16 %v1152, %v1151
  %1171 = vst [vmem:[#allocation3 + $0x10] sm:$0xff] %v1169
  %1172 = vst [vmem:[#allocation3 + $0x18] sm:$0xff] %v1170
  %s1173 = scalar_lea.vmem %s8, 64
  %v1174 = vld [vmem:[%s1173] sm:$0xf]
  %v1175 = vld [vmem:[%s1173 + $0x4] sm:$0xf]
  %v1176 = vld [vmem:[%s1173 + $0x8] sm:$0xf]
  %v1177 = vld [vmem:[%s1173 + $0xc] sm:$0xf]
  %v1178 = vld [vmem:[%s1173 + $0x10] sm:$0xf]
  %v1179 = vld [vmem:[%s1173 + $0x14] sm:$0xf]
  %v1180 = vld [vmem:[%s1173 + $0x18] sm:$0xf]
  %v1181 = vld [vmem:[%s1173 + $0x1c] sm:$0xf]
  %v1182 = vld [vmem:[#allocation3] sm:$0xff]
  %v1183 = vld [vmem:[#allocation3 + $0x8] sm:$0xff]
  %v1184 = vld [vmem:[#allocation3 + $0x10] sm:$0xff]
  %v1185 = vld [vmem:[#allocation3 + $0x18] sm:$0xff]
  %v1186 = vld [vmem:[#allocation3 + $0x20] sm:$0xff]
  %s1187 = scalar_lea.vmem %s9, 128
  %v1188 = vld [vmem:[%s1187] sm:$0xff]
  %v1189 = vld [vmem:[%s1187 + $0x8] sm:$0xff]
  %v1190 = vld [vmem:[%s1187 + $0x10] sm:$0xff]
  %v1191 = vld [vmem:[%s1187 + $0x18] sm:$0xff]
  %v1192 = vld [vmem:[%s1187 + $0x20] sm:$0xff]
  %v1193 = vld [vmem:[%s1187 + $0x28] sm:$0xff]
  %v1194 = vld [vmem:[%s1187 + $0x30] sm:$0xff]
  %v1195 = vld [vmem:[%s1187 + $0x38] sm:$0xff]
  %1197 = vset.pattern.permute.xlu0 0
  %1198 = vperm.xlu0 %1197, %v1188
  %v1199 = vpop.permute.xlu0 %1198
  %1202 = vset.pattern.permute.xlu0 0
  %1203 = vperm.xlu0 %1202, %v1189
  %v1204 = vpop.permute.xlu0 %1203
  %1207 = vset.pattern.permute.xlu0 0
  %1208 = vperm.xlu0 %1207, %v1190
  %v1209 = vpop.permute.xlu0 %1208
  %1212 = vset.pattern.permute.xlu0 0
  %1213 = vperm.xlu0 %1212, %v1191
  %v1214 = vpop.permute.xlu0 %1213
  %1217 = vset.pattern.permute.xlu0 0
  %1218 = vperm.xlu0 %1217, %v1192
  %v1219 = vpop.permute.xlu0 %1218
  %1222 = vset.pattern.permute.xlu0 0
  %1223 = vperm.xlu0 %1222, %v1193
  %v1224 = vpop.permute.xlu0 %1223
  %1227 = vset.pattern.permute.xlu0 0
  %1228 = vperm.xlu0 %1227, %v1194
  %v1229 = vpop.permute.xlu0 %1228
  %1232 = vset.pattern.permute.xlu0 0
  %1233 = vperm.xlu0 %1232, %v1195
  %v1234 = vpop.permute.xlu0 %1233
  %v1244 = vunpack.c.l.b16 %v1174
  %v1245 = vunpack.c.l.b16 %v1175
  %v1246 = vunpack.c.l.b16 %v1176
  %v1247 = vunpack.c.l.b16 %v1177
  %v1248 = vunpack.c.l.b16 %v1178
  %v1249 = vunpack.c.l.b16 %v1179
  %v1250 = vunpack.c.l.b16 %v1180
  %v1251 = vunpack.c.l.b16 %v1181
  %v1252 = vpack.c.b16 %v1245, %v1244
  %v1253 = vpack.c.b16 %v1247, %v1246
  %v1254 = vpack.c.b16 %v1249, %v1248
  %v1255 = vpack.c.b16 %v1251, %v1250
  %v1257 = vsel %vm597, %v1252, 0
  %v1260 = vsel %vm597, %v1253, 0
  %v1263 = vsel %vm597, %v1254, 0
  %v1266 = vsel %vm597, %v1255, 0
  %1268 = vmatprep.subr.bf16.mxu0 0
  %1269 = vmatpush1.bf16.msra.mxu0 %v1182
  %1270 = vmatprep.subr.bf16.mxu0 0
  %1271 = vmatpush1.bf16.msra.mxu0 %v1183
  %1272 = vmatprep.subr.bf16.mxu0 0
  %1273 = vmatpush1.bf16.msra.mxu0 %v1184
  %1274 = vmatprep.subr.bf16.mxu0 0
  %1275 = vmatpush1.bf16.msra.mxu0 %v1185
  %1276 = vmatprep.subr.bf16.mxu0 0
  %1277 = vmatpush1.bf16.msra.mxu0 %v1186
  %1278 = vmatprep.subr.bf16.mxu0 0
  %1279 = vmatpush1.bf16.msra.mxu0 0
  %1280 = vmatprep.subr.bf16.mxu0 0
  %1281 = vmatpush1.bf16.msra.mxu0 0
  %1282 = vmatprep.subr.bf16.mxu0 0
  %1283 = vmatpush1.bf16.msra.mxu0 0
  %1284 = vmatprep.subr.bf16.mxu0 0
  %1285 = vmatpush1.bf16.msra.mxu0 0
  %1286 = vmatprep.subr.bf16.mxu0 0
  %1287 = vmatpush1.bf16.msra.mxu0 0
  %1288 = vmatprep.subr.bf16.mxu0 0
  %1289 = vmatpush1.bf16.msra.mxu0 0
  %1290 = vmatprep.subr.bf16.mxu0 0
  %1291 = vmatpush1.bf16.msra.mxu0 0
  %1292 = vmatprep.subr.bf16.mxu0 0
  %1293 = vmatpush1.bf16.msra.mxu0 0
  %1294 = vmatprep.subr.bf16.mxu0 0
  %1295 = vmatpush1.bf16.msra.mxu0 0
  %1296 = vmatprep.subr.bf16.mxu0 0
  %1297 = vmatpush1.bf16.msra.mxu0 0
  %1298 = vmatprep.subr.bf16.mxu0 0
  %1299 = vmatpush1.bf16.msra.mxu0 0
  %1300 = vmatprep.mubr.bf16.mxu0 0
  %1301 = vmatmul.mubr.bf16.gmra.mrb[0].mxu0 %v1257
  %v1302 = vpop.f32.mrb[0].mxu0
  %v1303 = vadd.f32 %v1199, %v1302
  %v1304 = vpop.f32.mrb[0].mxu0
  %v1305 = vpop.f32.mrb[0].mxu0
  %v1306 = vadd.f32 %v1204, %v1305
  %v1307 = vpop.f32.mrb[0].mxu0
  %1308 = vmatprep.mubr.bf16.mxu0 0
  %1309 = vmatmul.mubr.bf16.gmra.mrb[0].mxu0 %v1260
  %v1310 = vpop.f32.mrb[0].mxu0
  %v1311 = vadd.f32 %v1209, %v1310
  %v1312 = vpop.f32.mrb[0].mxu0
  %v1313 = vpop.f32.mrb[0].mxu0
  %v1314 = vadd.f32 %v1214, %v1313
  %v1315 = vpop.f32.mrb[0].mxu0
  %1316 = vmatprep.mubr.bf16.mxu0 0
  %1317 = vmatmul.mubr.bf16.gmra.mrb[0].mxu0 %v1263
  %v1318 = vpop.f32.mrb[0].mxu0
  %v1319 = vadd.f32 %v1219, %v1318
  %v1320 = vpop.f32.mrb[0].mxu0
  %v1321 = vpop.f32.mrb[0].mxu0
  %v1322 = vadd.f32 %v1224, %v1321
  %v1323 = vpop.f32.mrb[0].mxu0
  %1324 = vmatprep.mubr.bf16.mxu0 0
  %1325 = vmatmul.mubr.bf16.gmra.mrb[0].mxu0 %v1266
  %v1326 = vpop.f32.mrb[0].mxu0
  %v1327 = vadd.f32 %v1229, %v1326
  %v1328 = vpop.f32.mrb[0].mxu0
  %v1329 = vpop.f32.mrb[0].mxu0
  %v1330 = vadd.f32 %v1234, %v1329
  %v1331 = vpop.f32.mrb[0].mxu0
  %1332 = vdwg.mxu0
  %s1333 = scalar_lea.vmem %s10, 64
  %v1334 = vld [vmem:[%s1333] sm:$0xff]
  %v1335 = vld [vmem:[%s1333 + $0x8] sm:$0xff]
  %v1336 = vld [vmem:[%s1333 + $0x10] sm:$0xff]
  %v1337 = vld [vmem:[%s1333 + $0x18] sm:$0xff]
  %s1338 = scalar_lea.vmem %s11, 64
  %v1339 = vld [vmem:[%s1338] sm:$0xff]
  %v1340 = vld [vmem:[%s1338 + $0x8] sm:$0xff]
  %v1341 = vld [vmem:[%s1338 + $0x10] sm:$0xff]
  %v1342 = vld [vmem:[%s1338 + $0x18] sm:$0xff]
  %v1343 = vtanh.pop %v1303
  %v1344 = vtanh.pop %v1306
  %v1345 = vtanh.pop %v1311
  %v1346 = vtanh.pop %v1314
  %v1347 = vtanh.pop %v1319
  %v1348 = vtanh.pop %v1322
  %v1349 = vtanh.pop %v1327
  %v1350 = vtanh.pop %v1330
  %v1351 = vmul.f32 %v1347, 0.5
  %v1352 = vmul.f32 %v1348, 0.5
  %v1353 = vmul.f32 %v1349, 0.5
  %v1354 = vmul.f32 %v1350, 0.5
  %v1355 = vadd.f32 %v1351, 0.5
  %v1356 = vadd.f32 %v1352, 0.5
  %v1357 = vadd.f32 %v1353, 0.5
  %v1358 = vadd.f32 %v1354, 0.5
  %v1359 = vmul.f32 %v1343, %v1355
  %v1360 = vmul.f32 %v1344, %v1356
  %v1361 = vmul.f32 %v1345, %v1357
  %v1362 = vmul.f32 %v1346, %v1358
  %v1363 = vmul.f32 %v1359, %v379
  %v1364 = vmul.f32 %v1360, %v379
  %v1365 = vmul.f32 %v1361, %v379
  %v1366 = vmul.f32 %v1362, %v379
  %1367 = vadd.xlane.f32.xlu0 %v1363
  %v1368 = vpop.xlane.xlu0 %1367
  %1369 = vadd.xlane.f32.xlu0 %v1364
  %v1370 = vpop.xlane.xlu0 %1369
  %1371 = vadd.xlane.f32.xlu0 %v1365
  %v1372 = vpop.xlane.xlu0 %1371
  %1373 = vadd.xlane.f32.xlu0 %v1366
  %v1374 = vpop.xlane.xlu0 %1373
  %v1375 = vmul.f32 %v1363, %v1359
  %v1376 = vmul.f32 %v1364, %v1360
  %v1377 = vmul.f32 %v1365, %v1361
  %v1378 = vmul.f32 %v1366, %v1362
  %1379 = vadd.xlane.f32.xlu0 %v1375
  %v1380 = vpop.xlane.xlu0 %1379
  %1381 = vadd.xlane.f32.xlu0 %v1376
  %v1382 = vpop.xlane.xlu0 %1381
  %1383 = vadd.xlane.f32.xlu0 %v1377
  %v1384 = vpop.xlane.xlu0 %1383
  %1385 = vadd.xlane.f32.xlu0 %v1378
  %v1386 = vpop.xlane.xlu0 %1385
  %v1387 = vmul.f32 %v1368, 0.03125
  %v1388 = vmul.f32 %v1370, 0.03125
  %v1389 = vmul.f32 %v1372, 0.03125
  %v1390 = vmul.f32 %v1374, 0.03125
  %v1391 = vmul.f32 %v1380, 0.03125
  %v1392 = vmul.f32 %v1382, 0.03125
  %v1393 = vmul.f32 %v1384, 0.03125
  %v1394 = vmul.f32 %v1386, 0.03125
  %v1395 = vmul.f32 %v1387, %v1387
  %v1396 = vmul.f32 %v1388, %v1388
  %v1397 = vmul.f32 %v1389, %v1389
  %v1398 = vmul.f32 %v1390, %v1390
  %v1399 = vsub.f32 %v1391, %v1395
  %v1400 = vsub.f32 %v1392, %v1396
  %v1401 = vsub.f32 %v1393, %v1397
  %v1402 = vsub.f32 %v1394, %v1398
  %v1403 = vadd.f32 %v1399, 1e-05
  %v1404 = vadd.f32 %v1400, 1e-05
  %v1405 = vadd.f32 %v1401, 1e-05
  %v1406 = vadd.f32 %v1402, 1e-05
  %v1407 = vrsqrt.pop %v1403
  %v1408 = vrsqrt.pop %v1404
  %v1409 = vrsqrt.pop %v1405
  %v1410 = vrsqrt.pop %v1406
  %v1411 = vmul.f32 %v1334, %v1407
  %v1412 = vmul.f32 %v1335, %v1408
  %v1413 = vmul.f32 %v1336, %v1409
  %v1414 = vmul.f32 %v1337, %v1410
  %v1415 = vmul.f32 %v1387, %v1411
  %v1416 = vmul.f32 %v1388, %v1412
  %v1417 = vmul.f32 %v1389, %v1413
  %v1418 = vmul.f32 %v1390, %v1414
  %v1419 = vsub.f32 %v1339, %v1415
  %v1420 = vsub.f32 %v1340, %v1416
  %v1421 = vsub.f32 %v1341, %v1417
  %v1422 = vsub.f32 %v1342, %v1418
  %1424 = vset.pattern.permute.xlu0 0
  %1425 = vperm.xlu0 %1424, %v1411
  %v1426 = vpop.permute.xlu0 %1425
  %1429 = vset.pattern.permute.xlu0 0
  %1430 = vperm.xlu0 %1429, %v1412
  %v1431 = vpop.permute.xlu0 %1430
  %1434 = vset.pattern.permute.xlu0 0
  %1435 = vperm.xlu0 %1434, %v1413
  %v1436 = vpop.permute.xlu0 %1435
  %1439 = vset.pattern.permute.xlu0 0
  %1440 = vperm.xlu0 %1439, %v1414
  %v1441 = vpop.permute.xlu0 %1440
  %v1443 = vmul.f32 %v1359, %v1426
  %v1444 = vmul.f32 %v1360, %v1431
  %v1445 = vmul.f32 %v1361, %v1436
  %v1446 = vmul.f32 %v1362, %v1441
  %1448 = vset.pattern.permute.xlu0 0
  %1449 = vperm.xlu0 %1448, %v1419
  %v1450 = vpop.permute.xlu0 %1449
  %1453 = vset.pattern.permute.xlu0 0
  %1454 = vperm.xlu0 %1453, %v1420
  %v1455 = vpop.permute.xlu0 %1454
  %1458 = vset.pattern.permute.xlu0 0
  %1459 = vperm.xlu0 %1458, %v1421
  %v1460 = vpop.permute.xlu0 %1459
  %1463 = vset.pattern.permute.xlu0 0
  %1464 = vperm.xlu0 %1463, %v1422
  %v1465 = vpop.permute.xlu0 %1464
  %v1467 = vadd.f32 %v1443, %v1450
  %v1468 = vadd.f32 %v1444, %v1455
  %v1469 = vadd.f32 %v1445, %v1460
  %v1470 = vadd.f32 %v1446, %v1465
  %v1471 = vadd.f32 %v1467, %v1149
  %v1472 = vadd.f32 %v1468, %v1150
  %v1473 = vadd.f32 %v1469, %v1151
  %v1474 = vadd.f32 %v1470, %v1152
  %1475 = vst [vmem:[#allocation2] sm:$0xff] %v1471
  %1476 = vst [vmem:[#allocation2 + $0x8] sm:$0xff] %v1472
  %1477 = vst [vmem:[#allocation2 + $0x10] sm:$0xff] %v1473
  %1478 = vst [vmem:[#allocation2 + $0x18] sm:$0xff] %v1474
  %v1479 = vld [vmem:[#allocation2] sm:$0xff]
  %v1480 = vld [vmem:[#allocation2 + $0x8] sm:$0xff]
  %v1481 = vld [vmem:[#allocation2 + $0x10] sm:$0xff]
  %v1482 = vld [vmem:[#allocation2 + $0x18] sm:$0xff]
  %1483 = vrot.lane.b32.xlu0 %v1479, 1
  %v1484 = vpop.permute.xlu0 %1483
  %1485 = vrot.lane.b32.xlu0 %v1480, 1
  %v1486 = vpop.permute.xlu0 %1485
  %1487 = vrot.lane.b32.xlu0 %v1481, 1
  %v1488 = vpop.permute.xlu0 %1487
  %1489 = vrot.lane.b32.xlu0 %v1482, 1
  %v1490 = vpop.permute.xlu0 %1489
  %v1491 = vmul.f32 %v1484, %v65
  %v1492 = vmul.f32 %v1486, %v65
  %v1493 = vmul.f32 %v1488, %v65
  %v1494 = vmul.f32 %v1490, %v65
  %v1495 = vpack.c.bf16 %v1492, %v1491
  %v1496 = vpack.c.bf16 %v1494, %v1493
  %1497 = vst [vmem:[#allocation3] sm:$0xff] %v1495
  %1498 = vst [vmem:[#allocation3 + $0x8] sm:$0xff] %v1496
  %v1499 = vpack.c.bf16 %v1480, %v1479
  %v1500 = vpack.c.bf16 %v1482, %v1481
  %1501 = vst [vmem:[#allocation3 + $0x10] sm:$0xff] %v1499
  %1502 = vst [vmem:[#allocation3 + $0x18] sm:$0xff] %v1500
  %s1503 = scalar_lea.vmem %s8, 96
  %v1504 = vld [vmem:[%s1503] sm:$0xf]
  %v1505 = vld [vmem:[%s1503 + $0x4] sm:$0xf]
  %v1506 = vld [vmem:[%s1503 + $0x8] sm:$0xf]
  %v1507 = vld [vmem:[%s1503 + $0xc] sm:$0xf]
  %v1508 = vld [vmem:[%s1503 + $0x10] sm:$0xf]
  %v1509 = vld [vmem:[%s1503 + $0x14] sm:$0xf]
  %v1510 = vld [vmem:[%s1503 + $0x18] sm:$0xf]
  %v1511 = vld [vmem:[%s1503 + $0x1c] sm:$0xf]
  %v1512 = vld [vmem:[#allocation3] sm:$0xff]
  %v1513 = vld [vmem:[#allocation3 + $0x8] sm:$0xff]
  %v1514 = vld [vmem:[#allocation3 + $0x10] sm:$0xff]
  %v1515 = vld [vmem:[#allocation3 + $0x18] sm:$0xff]
  %v1516 = vld [vmem:[#allocation3 + $0x20] sm:$0xff]
  %s1517 = scalar_lea.vmem %s9, 192
  %v1518 = vld [vmem:[%s1517] sm:$0xff]
  %v1519 = vld [vmem:[%s1517 + $0x8] sm:$0xff]
  %v1520 = vld [vmem:[%s1517 + $0x10] sm:$0xff]
  %v1521 = vld [vmem:[%s1517 + $0x18] sm:$0xff]
  %v1522 = vld [vmem:[%s1517 + $0x20] sm:$0xff]
  %v1523 = vld [vmem:[%s1517 + $0x28] sm:$0xff]
  %v1524 = vld [vmem:[%s1517 + $0x30] sm:$0xff]
  %v1525 = vld [vmem:[%s1517 + $0x38] sm:$0xff]
  %1527 = vset.pattern.permute.xlu0 0
  %1528 = vperm.xlu0 %1527, %v1518
  %v1529 = vpop.permute.xlu0 %1528
  %1532 = vset.pattern.permute.xlu0 0
  %1533 = vperm.xlu0 %1532, %v1519
  %v1534 = vpop.permute.xlu0 %1533
  %1537 = vset.pattern.permute.xlu0 0
  %1538 = vperm.xlu0 %1537, %v1520
  %v1539 = vpop.permute.xlu0 %1538
  %1542 = vset.pattern.permute.xlu0 0
  %1543 = vperm.xlu0 %1542, %v1521
  %v1544 = vpop.permute.xlu0 %1543
  %1547 = vset.pattern.permute.xlu0 0
  %1548 = vperm.xlu0 %1547, %v1522
  %v1549 = vpop.permute.xlu0 %1548
  %1552 = vset.pattern.permute.xlu0 0
  %1553 = vperm.xlu0 %1552, %v1523
  %v1554 = vpop.permute.xlu0 %1553
  %1557 = vset.pattern.permute.xlu0 0
  %1558 = vperm.xlu0 %1557, %v1524
  %v1559 = vpop.permute.xlu0 %1558
  %1562 = vset.pattern.permute.xlu0 0
  %1563 = vperm.xlu0 %1562, %v1525
  %v1564 = vpop.permute.xlu0 %1563
  %v1574 = vunpack.c.l.b16 %v1504
  %v1575 = vunpack.c.l.b16 %v1505
  %v1576 = vunpack.c.l.b16 %v1506
  %v1577 = vunpack.c.l.b16 %v1507
  %v1578 = vunpack.c.l.b16 %v1508
  %v1579 = vunpack.c.l.b16 %v1509
  %v1580 = vunpack.c.l.b16 %v1510
  %v1581 = vunpack.c.l.b16 %v1511
  %v1582 = vpack.c.b16 %v1575, %v1574
  %v1583 = vpack.c.b16 %v1577, %v1576
  %v1584 = vpack.c.b16 %v1579, %v1578
  %v1585 = vpack.c.b16 %v1581, %v1580
  %v1587 = vsel %vm597, %v1582, 0
  %v1590 = vsel %vm597, %v1583, 0
  %v1593 = vsel %vm597, %v1584, 0
  %v1596 = vsel %vm597, %v1585, 0
  %1598 = vmatprep.subr.bf16.mxu0 0
  %1599 = vmatpush1.bf16.msra.mxu0 %v1512
  %1600 = vmatprep.subr.bf16.mxu0 0
  %1601 = vmatpush1.bf16.msra.mxu0 %v1513
  %1602 = vmatprep.subr.bf16.mxu0 0
  %1603 = vmatpush1.bf16.msra.mxu0 %v1514
  %1604 = vmatprep.subr.bf16.mxu0 0
  %1605 = vmatpush1.bf16.msra.mxu0 %v1515
  %1606 = vmatprep.subr.bf16.mxu0 0
  %1607 = vmatpush1.bf16.msra.mxu0 %v1516
  %1608 = vmatprep.subr.bf16.mxu0 0
  %1609 = vmatpush1.bf16.msra.mxu0 0
  %1610 = vmatprep.subr.bf16.mxu0 0
  %1611 = vmatpush1.bf16.msra.mxu0 0
  %1612 = vmatprep.subr.bf16.mxu0 0
  %1613 = vmatpush1.bf16.msra.mxu0 0
  %1614 = vmatprep.subr.bf16.mxu0 0
  %1615 = vmatpush1.bf16.msra.mxu0 0
  %1616 = vmatprep.subr.bf16.mxu0 0
  %1617 = vmatpush1.bf16.msra.mxu0 0
  %1618 = vmatprep.subr.bf16.mxu0 0
  %1619 = vmatpush1.bf16.msra.mxu0 0
  %1620 = vmatprep.subr.bf16.mxu0 0
  %1621 = vmatpush1.bf16.msra.mxu0 0
  %1622 = vmatprep.subr.bf16.mxu0 0
  %1623 = vmatpush1.bf16.msra.mxu0 0
  %1624 = vmatprep.subr.bf16.mxu0 0
  %1625 = vmatpush1.bf16.msra.mxu0 0
  %1626 = vmatprep.subr.bf16.mxu0 0
  %1627 = vmatpush1.bf16.msra.mxu0 0
  %1628 = vmatprep.subr.bf16.mxu0 0
  %1629 = vmatpush1.bf16.msra.mxu0 0
  %1630 = vmatprep.mubr.bf16.mxu0 0
  %1631 = vmatmul.mubr.bf16.gmra.mrb[0].mxu0 %v1587
  %v1632 = vpop.f32.mrb[0].mxu0
  %v1633 = vadd.f32 %v1529, %v1632
  %v1634 = vpop.f32.mrb[0].mxu0
  %v1635 = vpop.f32.mrb[0].mxu0
  %v1636 = vadd.f32 %v1534, %v1635
  %v1637 = vpop.f32.mrb[0].mxu0
  %1638 = vmatprep.mubr.bf16.mxu0 0
  %1639 = vmatmul.mubr.bf16.gmra.mrb[0].mxu0 %v1590
  %v1640 = vpop.f32.mrb[0].mxu0
  %v1641 = vadd.f32 %v1539, %v1640
  %v1642 = vpop.f32.mrb[0].mxu0
  %v1643 = vpop.f32.mrb[0].mxu0
  %v1644 = vadd.f32 %v1544, %v1643
  %v1645 = vpop.f32.mrb[0].mxu0
  %1646 = vmatprep.mubr.bf16.mxu0 0
  %1647 = vmatmul.mubr.bf16.gmra.mrb[0].mxu0 %v1593
  %v1648 = vpop.f32.mrb[0].mxu0
  %v1649 = vadd.f32 %v1549, %v1648
  %v1650 = vpop.f32.mrb[0].mxu0
  %v1651 = vpop.f32.mrb[0].mxu0
  %v1652 = vadd.f32 %v1554, %v1651
  %v1653 = vpop.f32.mrb[0].mxu0
  %1654 = vmatprep.mubr.bf16.mxu0 0
  %1655 = vmatmul.mubr.bf16.gmra.mrb[0].mxu0 %v1596
  %v1656 = vpop.f32.mrb[0].mxu0
  %v1657 = vadd.f32 %v1559, %v1656
  %v1658 = vpop.f32.mrb[0].mxu0
  %v1659 = vpop.f32.mrb[0].mxu0
  %v1660 = vadd.f32 %v1564, %v1659
  %v1661 = vpop.f32.mrb[0].mxu0
  %1662 = vdwg.mxu0
  %s1663 = scalar_lea.vmem %s10, 96
  %v1664 = vld [vmem:[%s1663] sm:$0xff]
  %v1665 = vld [vmem:[%s1663 + $0x8] sm:$0xff]
  %v1666 = vld [vmem:[%s1663 + $0x10] sm:$0xff]
  %v1667 = vld [vmem:[%s1663 + $0x18] sm:$0xff]
  %s1668 = scalar_lea.vmem %s11, 96
  %v1669 = vld [vmem:[%s1668] sm:$0xff]
  %v1670 = vld [vmem:[%s1668 + $0x8] sm:$0xff]
  %v1671 = vld [vmem:[%s1668 + $0x10] sm:$0xff]
  %v1672 = vld [vmem:[%s1668 + $0x18] sm:$0xff]
  %v1673 = vtanh.pop %v1633
  %v1674 = vtanh.pop %v1636
  %v1675 = vtanh.pop %v1641
  %v1676 = vtanh.pop %v1644
  %v1677 = vtanh.pop %v1649
  %v1678 = vtanh.pop %v1652
  %v1679 = vtanh.pop %v1657
  %v1680 = vtanh.pop %v1660
  %v1681 = vmul.f32 %v1677, 0.5
  %v1682 = vmul.f32 %v1678, 0.5
  %v1683 = vmul.f32 %v1679, 0.5
  %v1684 = vmul.f32 %v1680, 0.5
  %v1685 = vadd.f32 %v1681, 0.5
  %v1686 = vadd.f32 %v1682, 0.5
  %v1687 = vadd.f32 %v1683, 0.5
  %v1688 = vadd.f32 %v1684, 0.5
  %v1689 = vmul.f32 %v1673, %v1685
  %v1690 = vmul.f32 %v1674, %v1686
  %v1691 = vmul.f32 %v1675, %v1687
  %v1692 = vmul.f32 %v1676, %v1688
  %v1693 = vmul.f32 %v1689, %v379
  %v1694 = vmul.f32 %v1690, %v379
  %v1695 = vmul.f32 %v1691, %v379
  %v1696 = vmul.f32 %v1692, %v379
  %1697 = vadd.xlane.f32.xlu0 %v1693
  %v1698 = vpop.xlane.xlu0 %1697
  %1699 = vadd.xlane.f32.xlu0 %v1694
  %v1700 = vpop.xlane.xlu0 %1699
  %1701 = vadd.xlane.f32.xlu0 %v1695
  %v1702 = vpop.xlane.xlu0 %1701
  %1703 = vadd.xlane.f32.xlu0 %v1696
  %v1704 = vpop.xlane.xlu0 %1703
  %v1705 = vmul.f32 %v1693, %v1689
  %v1706 = vmul.f32 %v1694, %v1690
  %v1707 = vmul.f32 %v1695, %v1691
  %v1708 = vmul.f32 %v1696, %v1692
  %1709 = vadd.xlane.f32.xlu0 %v1705
  %v1710 = vpop.xlane.xlu0 %1709
  %1711 = vadd.xlane.f32.xlu0 %v1706
  %v1712 = vpop.xlane.xlu0 %1711
  %1713 = vadd.xlane.f32.xlu0 %v1707
  %v1714 = vpop.xlane.xlu0 %1713
  %1715 = vadd.xlane.f32.xlu0 %v1708
  %v1716 = vpop.xlane.xlu0 %1715
  %v1717 = vmul.f32 %v1698, 0.03125
  %v1718 = vmul.f32 %v1700, 0.03125
  %v1719 = vmul.f32 %v1702, 0.03125
  %v1720 = vmul.f32 %v1704, 0.03125
  %v1721 = vmul.f32 %v1710, 0.03125
  %v1722 = vmul.f32 %v1712, 0.03125
  %v1723 = vmul.f32 %v1714, 0.03125
  %v1724 = vmul.f32 %v1716, 0.03125
  %v1725 = vmul.f32 %v1717, %v1717
  %v1726 = vmul.f32 %v1718, %v1718
  %v1727 = vmul.f32 %v1719, %v1719
  %v1728 = vmul.f32 %v1720, %v1720
  %v1729 = vsub.f32 %v1721, %v1725
  %v1730 = vsub.f32 %v1722, %v1726
  %v1731 = vsub.f32 %v1723, %v1727
  %v1732 = vsub.f32 %v1724, %v1728
  %v1733 = vadd.f32 %v1729, 1e-05
  %v1734 = vadd.f32 %v1730, 1e-05
  %v1735 = vadd.f32 %v1731, 1e-05
  %v1736 = vadd.f32 %v1732, 1e-05
  %v1737 = vrsqrt.pop %v1733
  %v1738 = vrsqrt.pop %v1734
  %v1739 = vrsqrt.pop %v1735
  %v1740 = vrsqrt.pop %v1736
  %v1741 = vmul.f32 %v1664, %v1737
  %v1742 = vmul.f32 %v1665, %v1738
  %v1743 = vmul.f32 %v1666, %v1739
  %v1744 = vmul.f32 %v1667, %v1740
  %v1745 = vmul.f32 %v1717, %v1741
  %v1746 = vmul.f32 %v1718, %v1742
  %v1747 = vmul.f32 %v1719, %v1743
  %v1748 = vmul.f32 %v1720, %v1744
  %v1749 = vsub.f32 %v1669, %v1745
  %v1750 = vsub.f32 %v1670, %v1746
  %v1751 = vsub.f32 %v1671, %v1747
  %v1752 = vsub.f32 %v1672, %v1748
  %1754 = vset.pattern.permute.xlu0 0
  %1755 = vperm.xlu0 %1754, %v1741
  %v1756 = vpop.permute.xlu0 %1755
  %1759 = vset.pattern.permute.xlu0 0
  %1760 = vperm.xlu0 %1759, %v1742
  %v1761 = vpop.permute.xlu0 %1760
  %1764 = vset.pattern.permute.xlu0 0
  %1765 = vperm.xlu0 %1764, %v1743
  %v1766 = vpop.permute.xlu0 %1765
  %1769 = vset.pattern.permute.xlu0 0
  %1770 = vperm.xlu0 %1769, %v1744
  %v1771 = vpop.permute.xlu0 %1770
  %v1773 = vmul.f32 %v1689, %v1756
  %v1774 = vmul.f32 %v1690, %v1761
  %v1775 = vmul.f32 %v1691, %v1766
  %v1776 = vmul.f32 %v1692, %v1771
  %1778 = vset.pattern.permute.xlu0 0
  %1779 = vperm.xlu0 %1778, %v1749
  %v1780 = vpop.permute.xlu0 %1779
  %1783 = vset.pattern.permute.xlu0 0
  %1784 = vperm.xlu0 %1783, %v1750
  %v1785 = vpop.permute.xlu0 %1784
  %1788 = vset.pattern.permute.xlu0 0
  %1789 = vperm.xlu0 %1788, %v1751
  %v1790 = vpop.permute.xlu0 %1789
  %1793 = vset.pattern.permute.xlu0 0
  %1794 = vperm.xlu0 %1793, %v1752
  %v1795 = vpop.permute.xlu0 %1794
  %v1797 = vadd.f32 %v1773, %v1780
  %v1798 = vadd.f32 %v1774, %v1785
  %v1799 = vadd.f32 %v1775, %v1790
  %v1800 = vadd.f32 %v1776, %v1795
  %v1801 = vadd.f32 %v1797, %v1479
  %v1802 = vadd.f32 %v1798, %v1480
  %v1803 = vadd.f32 %v1799, %v1481
  %v1804 = vadd.f32 %v1800, %v1482
  %1805 = vst [vmem:[#allocation2] sm:$0xff] %v1801
  %1806 = vst [vmem:[#allocation2 + $0x8] sm:$0xff] %v1802
  %1807 = vst [vmem:[#allocation2 + $0x10] sm:$0xff] %v1803
  %1808 = vst [vmem:[#allocation2 + $0x18] sm:$0xff] %v1804
  %v1809 = vld [vmem:[%s12] sm:$0xff]
  %v1810 = vld [vmem:[#allocation2] sm:$0xff]
  %v1811 = vld [vmem:[#allocation2 + $0x8] sm:$0xff]
  %v1812 = vld [vmem:[#allocation2 + $0x10] sm:$0xff]
  %v1813 = vld [vmem:[#allocation2 + $0x18] sm:$0xff]
  %v1814 = vld [vmem:[%s13] sm:$0xff]
  %1816 = vset.pattern.permute.xlu0 0
  %1817 = vperm.xlu0 %1816, %v1814
  %v1818 = vpop.permute.xlu0 %1817
  %vm1820 = vcmask 261120
  %v1822 = vsel %vm1820, %v1809, 0
  %1824 = vmatprep.subr.mxu0 0.0
  %1825 = vmatpush1.msra.mxu0 %v1810
  %1826 = vmatprep.subr.mxu0 0.0
  %1827 = vmatpush1.msra.mxu0 %v1811
  %1828 = vmatprep.subr.mxu0 0.0
  %1829 = vmatpush1.msra.mxu0 %v1812
  %1830 = vmatprep.subr.mxu0 0.0
  %1831 = vmatpush1.msra.mxu0 %v1813
  %1832 = vmatprep.subr.mxu0 0.0
  %1833 = vmatpush1.msra.mxu0 0.0
  %1834 = vmatprep.subr.mxu0 0.0
  %1835 = vmatpush1.msra.mxu0 0.0
  %1836 = vmatprep.subr.mxu0 0.0
  %1837 = vmatpush1.msra.mxu0 0.0
  %1838 = vmatprep.subr.mxu0 0.0
  %1839 = vmatpush1.msra.mxu0 0.0
  %1840 = vmatprep.subr.mxu0 0.0
  %1841 = vmatpush1.msra.mxu0 0.0
  %1842 = vmatprep.subr.mxu0 0.0
  %1843 = vmatpush1.msra.mxu0 0.0
  %1844 = vmatprep.subr.mxu0 0.0
  %1845 = vmatpush1.msra.mxu0 0.0
  %1846 = vmatprep.subr.mxu0 0.0
  %1847 = vmatpush1.msra.mxu0 0.0
  %1848 = vmatprep.subr.mxu0 0.0
  %1849 = vmatpush1.msra.mxu0 0.0
  %1850 = vmatprep.subr.mxu0 0.0
  %1851 = vmatpush1.msra.mxu0 0.0
  %1852 = vmatprep.subr.mxu0 0.0
  %1853 = vmatpush1.msra.mxu0 0.0
  %1854 = vmatprep.subr.mxu0 0.0
  %1855 = vmatpush1.msra.mxu0 0.0
  %1856 = vmatprep.subr.mxu0 0.0
  %1857 = vmatpush1.msra.mxu0 0.0
  %1858 = vmatprep.subr.mxu0 0.0
  %1859 = vmatpush1.msra.mxu0 0.0
  %1860 = vmatprep.subr.mxu0 0.0
  %1861 = vmatpush1.msra.mxu0 0.0
  %1862 = vmatprep.subr.mxu0 0.0
  %1863 = vmatpush1.msra.mxu0 0.0
  %1864 = vmatprep.subr.mxu0 0.0
  %1865 = vmatpush1.msra.mxu0 0.0
  %1866 = vmatprep.subr.mxu0 0.0
  %1867 = vmatpush1.msra.mxu0 0.0
  %1868 = vmatprep.subr.mxu0 0.0
  %1869 = vmatpush1.msra.mxu0 0.0
  %1870 = vmatprep.subr.mxu0 0.0
  %1871 = vmatpush1.msra.mxu0 0.0
  %1872 = vmatprep.subr.mxu0 0.0
  %1873 = vmatpush1.msra.mxu0 0.0
  %1874 = vmatprep.subr.mxu0 0.0
  %1875 = vmatpush1.msra.mxu0 0.0
  %1876 = vmatprep.subr.mxu0 0.0
  %1877 = vmatpush1.msra.mxu0 0.0
  %1878 = vmatprep.subr.mxu0 0.0
  %1879 = vmatpush1.msra.mxu0 0.0
  %1880 = vmatprep.subr.mxu0 0.0
  %1881 = vmatpush1.msra.mxu0 0.0
  %1882 = vmatprep.subr.mxu0 0.0
  %1883 = vmatpush1.msra.mxu0 0.0
  %1884 = vmatprep.subr.mxu0 0.0
  %1885 = vmatpush1.msra.mxu0 0.0
  %1886 = vmatprep.subr.mxu0 0.0
  %1887 = vmatpush1.msra.mxu0 0.0
  %1888 = vmatprep.mubr.f32.mxu0 0.0
  %1889 = vmatmul.mubr.f32.gmra.mrb[0].mxu0 %v1822
  %v1890 = vpop.f32.mrb[0].mxu0
  %v1891 = vadd.f32 %v1818, %v1890
  %v1892 = vpop.f32.mrb[0].mxu0
  %1893 = vdwg.mxu0
  %1894 = vst [vmem:[%s14] sm:$0xff] %v1891
  // Predicated region
  $region58: #{pixelcnn_forward.1} parent=0 // pred_check
    _
  $region59: #{pixelcnn_forward.1} parent=0 // pred_check_branch
    %1896 = sbr.rel (0) target = $region61
  $region60: #{pixelcnn_forward.1} parent=0 // pred_region
    _
  $region61: #{pixelcnn_forward.1} parent=0 // pred_fallthru
    _
  // Predicated region
  $region62: #{pixelcnn_forward.1} parent=0 // pred_check
    _
  $region63: #{pixelcnn_forward.1} parent=0 // pred_check_branch
    %1898 = sbr.rel (0) target = $region65
  $region64: #{pixelcnn_forward.1} parent=0 // pred_region
    _
  $region65: #{pixelcnn_forward.1} parent=0 // pred_fallthru
    _

</llo_original>
